<compile_context>
chip_gen: v5e
topology: v5e:2x2
jax: 0.10.0
libtpu: 0.0.40
codegen_flags: <defaults>
</compile_context>

<pallas_src>
import functools

import jax
import jax.numpy as jnp
from jax import lax
from jax.experimental import pallas as pl
from jax.experimental.pallas import tpu as pltpu


def _round_up(x, m):
    return ((x + m - 1) // m) * m


def _pick_row_tile(h_out, w_out, ocp, kcp, max_rows, budget_bytes):
    """Largest divisor `th` of h_out with th*w_out matmul rows under budget."""
    # Rough per-row VMEM: 2x out tile (f32, double-buffered) + f32 acc temp
    # + one bf16 LHS slab.  Leave the rest of the budget for the resident
    # image / weights.
    per_row = ocp * 4 * 3 + kcp * 2
    rows_cap = max(w_out, budget_bytes // max(per_row, 1))
    cap = min(max_rows, rows_cap)
    th = 1
    for d in range(1, h_out + 1):
        if h_out % d == 0 and d * w_out <= cap:
            th = d
    return th


# ----------------------------------------------------------------------------
# Pallas kernel: one (batch, row-tile) step of  relu(conv(x)) as K accumulated
# matmuls (one per kernel row dy), no im2col scratch.
# ----------------------------------------------------------------------------
def _conv_relu_kernel(xw_ref, w_ref, b_ref, o_ref, *, K, Wo, th, stride, L):
    # xw_ref: (1, S*L, Wo, KCp) bf16  W-im2col'd, stride-phase-split image
    #                                 (resident for this batch index)
    # w_ref : (K, KCp, OCp)     bf16  per-dy weight slabs (grid-resident)
    # b_ref : (1, OCp)          f32   bias (zero-padded), grid-resident
    # o_ref : (1, th*Wo, OCp)   f32   output tile (lane-dense minor dim = OCp)
    t = pl.program_id(1)
    r0 = t * th                                  # first output row of this tile
    mt = th * Wo
    ocp = o_ref.shape[-1]

    acc = jnp.zeros((mt, ocp), jnp.float32)
    for dy in range(K):
        # Input row for output row r and kernel row dy is r*stride + dy, which
        # lives at phase (dy % stride), intra-phase index r + dy//stride.
        row0 = (dy % stride) * L + dy // stride
        slab = xw_ref[0, pl.ds(row0 + r0, th), :, :]        # (th, Wo, KCp) bf16
        lhs = slab.reshape(mt, -1)                          # (mt, KCp)
        acc = acc + jnp.dot(lhs, w_ref[dy],
                            preferred_element_type=jnp.float32)

    acc = acc + b_ref[...]                       # (1, OCp) broadcasts over rows
    o_ref[0] = jnp.maximum(acc, 0.0).astype(o_ref.dtype)    # f32 epilogue


# ----------------------------------------------------------------------------
# ConvLayer forward
# ----------------------------------------------------------------------------
def conv_layer_forward(x, weight, bias, *, kernel_size, stride=1, padding=0,
                       max_tile_rows=1024, vmem_limit_bytes=48 * 1024 * 1024,
                       channels_last_out=False):
    """Equivalent of F.relu(nn.Conv2d(...)(x)) for NCHW input `x`.

    x      : (N, C, H, W)   float32
    weight : (OC, C, K, K)  PyTorch Conv2d weight layout
    bias   : (OC,)
    """
    N, C, H, W = x.shape
    OC, wc, K, K2 = weight.shape
    assert K == kernel_size and K2 == kernel_size and wc == C

    # ---------------- wrapper-side prep (original-size tensors only) ---------
    # NCHW -> NHWC, zero-pad, round to bf16 once (operands go straight to MXU).
    xp = jnp.transpose(x, (0, 2, 3, 1)).astype(jnp.bfloat16)
    if padding > 0:
        xp = jnp.pad(xp, ((0, 0), (padding, padding), (padding, padding), (0, 0)))
    Hp, Wp = H + 2 * padding, W + 2 * padding
    Ho = (Hp - K) // stride + 1
    Wo = (Wp - K) // stride + 1
    assert Ho > 0 and Wo > 0

    KC = K * C
    KCp = _round_up(KC, 8)                       # sublane-friendly contraction
    ocp = _round_up(max(OC, 128), 128)           # lane-dense output channels

    # Width-only im2col (HBM inflation ~K/stride, NOT K*K):
    #   xw[n, h, w, dx*C + c] = xp[n, h, w*stride + dx, c]
    cols = [xp[:, :, dx:dx + (Wo - 1) * stride + 1:stride, :] for dx in range(K)]
    xw = jnp.concatenate(cols, axis=-1)                          # (N, Hp, Wo, K*C)
    if KCp > KC:
        xw = jnp.pad(xw, ((0, 0), (0, 0), (0, 0), (0, KCp - KC)))

    # De-interleave H into `stride` phases so every per-dy read in the kernel is
    # a contiguous unit-stride slice (no doubly-strided in-kernel reads).
    S = stride
    L = -(-Hp // S)                                              # ceil(Hp / S)
    if S > 1:
        xw = jnp.pad(xw, ((0, 0), (0, L * S - Hp), (0, 0), (0, 0)))
        xw = xw.reshape(N, L, S, Wo, KCp).transpose(0, 2, 1, 3, 4)
        xw = xw.reshape(N, S * L, Wo, KCp)       # row p*L + j holds input row j*S + p
    # else: xw is already (N, Hp, Wo, KCp) with S*L == Hp.

    # Weight: (OC, C, K, K) -> per-dy slabs (K, K*C, OC) with (dx, c) row order,
    # zero-padded to (K, KCp, OCp), bf16 for the MXU (accumulation stays f32).
    w_mat = jnp.transpose(weight, (2, 3, 1, 0)).reshape(K, KC, OC)
    w_mat = jnp.pad(w_mat, ((0, 0), (0, KCp - KC), (0, ocp - OC))).astype(jnp.bfloat16)
    bias2d = jnp.pad(bias.astype(jnp.float32), (0, ocp - OC)).reshape(1, ocp)

    # Row tile: as many matmul rows as the VMEM budget allows (targets mt >= 256
    # on realistic shapes; the tiny demo simply uses the whole image).
    th = _pick_row_tile(Ho, Wo, ocp, KCp, max_tile_rows, vmem_limit_bytes // 4)
    n_ht = Ho // th
    mt = th * Wo
    # TODO(synk): for batch>2 with tiny Ho*Wo, pack several images' row tiles
    # into one grid step to grow mt, while keeping >=2 parallel steps for v7x.

    kernel = functools.partial(_conv_relu_kernel, K=K, Wo=Wo, th=th,
                               stride=stride, L=L)

    cost = pl.CostEstimate(
        flops=2 * N * Ho * Wo * K * K * C * OC,
        transcendentals=0,
        bytes_accessed=(xw.size * 2 + w_mat.size * 2 + bias2d.size * 4
                        + N * Ho * Wo * ocp * 4))

    out = pl.pallas_call(
        kernel,
        out_shape=jax.ShapeDtypeStruct((N, Ho * Wo, ocp), jnp.float32),
        grid_spec=pltpu.PrefetchScalarGridSpec(
            num_scalar_prefetch=0,
            grid=(N, n_ht),
            in_specs=[
                # Full W-expanded image per batch index (resident across row tiles).
                # TODO(synk): for very large images, block H with a halo of
                # th*stride + K - 1 rows instead of full residency (v7x 64 MiB),
                # and single-buffer the grid-invariant weight/bias blocks
                # (pipeline_mode=pl.Buffered(1)).
                pl.BlockSpec((1, S * L, Wo, KCp), lambda n, t: (n, 0, 0, 0)),
                # Per-dy weight slabs and bias: resident across the whole grid.
                pl.BlockSpec((K, KCp, ocp), lambda n, t: (0, 0, 0)),
                pl.BlockSpec((1, ocp), lambda n, t: (0, 0)),
            ],
            out_specs=pl.BlockSpec((1, mt, ocp), lambda n, t: (n, t, 0)),
        ),
        compiler_params=pltpu.CompilerParams(
            dimension_semantics=("parallel", "parallel"),
            vmem_limit_bytes=vmem_limit_bytes),
        cost_estimate=cost,
    )(xw, w_mat, bias2d)

    # (N, Ho*Wo, OCp) -> NHWC / NCHW.
    out = out[:, :, :OC].reshape(N, Ho, Wo, OC)
    if channels_last_out:
        return out                               # skips the extra HBM transpose pass
    return jnp.transpose(out, (0, 3, 1, 2))      # NCHW, matching nn.Conv2d + ReLU


# ----------------------------------------------------------------------------
# Demo / self-check
# ----------------------------------------------------------------------------
if __name__ == "__main__":
    batch = 2
    in_channels = 4
    out_channels = 256      # module default -> naturally lane-dense output
    kernel_size = 9         # module default
    stride = 1
    padding = 0
    spatial = 16            # -> output spatial = (16 - 9) // 1 + 1 = 8

    key = jax.random.PRNGKey(0)
    kx, kw, kb = jax.random.split(key, 3)

    x = jax.random.normal(kx, (batch, in_channels, spatial, spatial),
                          dtype=jnp.float32)
    fan_in = in_channels * kernel_size * kernel_size
    bound = 1.0 / (fan_in ** 0.5)
    weight = jax.random.uniform(
        kw, (out_channels, in_channels, kernel_size, kernel_size),
        minval=-bound, maxval=bound, dtype=jnp.float32)
    bias = jax.random.uniform(kb, (out_channels,), minval=-bound,
                              maxval=bound, dtype=jnp.float32)

    fwd = jax.jit(functools.partial(conv_layer_forward,
                                    kernel_size=kernel_size,
                                    stride=stride, padding=padding))
    out = jax.block_until_ready(fwd(x, weight, bias))

    # Reference: XLA conv + bias + ReLU on the same bf16-rounded operands the
    # kernel feeds to the MXU (accumulation is f32 in both paths).
    xq = x.astype(jnp.bfloat16).astype(jnp.float32)
    wq = weight.astype(jnp.bfloat16).astype(jnp.float32)
    ref = lax.conv_general_dilated(
        xq, wq, window_strides=(stride, stride),
        padding=[(padding, padding), (padding, padding)],
        dimension_numbers=("NCHW", "OIHW", "NCHW"),
        precision=lax.Precision.HIGHEST)
    ref = jnp.maximum(ref + bias[None, :, None, None], 0.0)

    assert out.shape == (batch, out_channels, 8, 8), out.shape
    max_err = float(jnp.max(jnp.abs(out - ref)))
    assert jnp.allclose(out, ref, atol=2e-3, rtol=2e-3), max_err

    print("KERNEL_OK")
</pallas_src>

<mosaic_0001>
module attributes {stable_mosaic.version = 11 : i64} {
  func.func @_conv_relu_kernel(%arg0: i32, %arg1: i32, %arg2: memref<1x16x8x40xbf16, #tpu.memory_space<vmem>>, %arg3: memref<9x40x256xbf16, #tpu.memory_space<vmem>>, %arg4: memref<1x256xf32, #tpu.memory_space<vmem>>, %arg5: memref<1x64x256xf32, #tpu.memory_space<vmem>>) attributes {dimension_semantics = [#tpu.dimension_semantics<parallel>, #tpu.dimension_semantics<parallel>], iteration_bounds = array<i64: 2, 1>, scalar_prefetch = 0 : i64, scratch_operands = 0 : i64, tpu.core_type = #tpu.core_type<tc>, window_params = [{transform_indices = @transform_0, window_bounds = array<i64: 1, 16, 8, 40>}, {pipeline_mode = #tpu.pipeline_mode<synchronous>, transform_indices = @transform_1, window_bounds = array<i64: 9, 40, 256>}, {pipeline_mode = #tpu.pipeline_mode<synchronous>, transform_indices = @transform_2, window_bounds = array<i64: 1, 256>}, {transform_indices = @transform_3, window_bounds = array<i64: 1, 64, 256>}]} {
    %c8_i32 = arith.constant 8 : i32
    %0 = arith.muli %arg1, %c8_i32 : i32
    %cst = arith.constant 0.000000e+00 : f32
    %1 = vector.broadcast %cst : f32 to vector<64x256xf32>
    %c0_i32 = arith.constant 0 : i32
    %2 = arith.addi %c0_i32, %0 : i32
    %c0 = arith.constant 0 : index
    %3 = arith.index_cast %2 : i32 to index
    %c0_0 = arith.constant 0 : index
    %c0_1 = arith.constant 0 : index
    %4 = vector.load %arg2[%c0, %3, %c0_0, %c0_1] : memref<1x16x8x40xbf16, #tpu.memory_space<vmem>>, vector<1x8x8x40xbf16>
    %5 = vector.shape_cast %4 : vector<1x8x8x40xbf16> to vector<8x8x40xbf16>
    %6 = vector.shape_cast %5 : vector<8x8x40xbf16> to vector<64x40xbf16>
    %c0_2 = arith.constant 0 : index
    %c0_3 = arith.constant 0 : index
    %c0_4 = arith.constant 0 : index
    %7 = vector.load %arg3[%c0_2, %c0_3, %c0_4] : memref<9x40x256xbf16, #tpu.memory_space<vmem>>, vector<1x40x256xbf16>
    %8 = vector.shape_cast %7 : vector<1x40x256xbf16> to vector<40x256xbf16>
    %cst_5 = arith.constant dense<0.000000e+00> : vector<64x256xf32>
    %9 = tpu.matmul %6, %8, %cst_5 {dimension_numbers = #tpu.dot_dimension_numbers<[1], [0], [0], [1], [0, 0, 1, 1], [], []>} : vector<64x40xbf16>, vector<40x256xbf16>, vector<64x256xf32> -> vector<64x256xf32>
    %10 = arith.addf %1, %9 : vector<64x256xf32>
    %c1_i32 = arith.constant 1 : i32
    %11 = arith.addi %c1_i32, %0 : i32
    %c0_6 = arith.constant 0 : index
    %12 = arith.index_cast %11 : i32 to index
    %c0_7 = arith.constant 0 : index
    %c0_8 = arith.constant 0 : index
    %13 = vector.load %arg2[%c0_6, %12, %c0_7, %c0_8] : memref<1x16x8x40xbf16, #tpu.memory_space<vmem>>, vector<1x8x8x40xbf16>
    %14 = vector.shape_cast %13 : vector<1x8x8x40xbf16> to vector<8x8x40xbf16>
    %15 = vector.shape_cast %14 : vector<8x8x40xbf16> to vector<64x40xbf16>
    %c1 = arith.constant 1 : index
    %c0_9 = arith.constant 0 : index
    %c0_10 = arith.constant 0 : index
    %16 = vector.load %arg3[%c1, %c0_9, %c0_10] : memref<9x40x256xbf16, #tpu.memory_space<vmem>>, vector<1x40x256xbf16>
    %17 = vector.shape_cast %16 : vector<1x40x256xbf16> to vector<40x256xbf16>
    %cst_11 = arith.constant dense<0.000000e+00> : vector<64x256xf32>
    %18 = tpu.matmul %15, %17, %cst_11 {dimension_numbers = #tpu.dot_dimension_numbers<[1], [0], [0], [1], [0, 0, 1, 1], [], []>} : vector<64x40xbf16>, vector<40x256xbf16>, vector<64x256xf32> -> vector<64x256xf32>
    %19 = arith.addf %10, %18 : vector<64x256xf32>
    %c2_i32 = arith.constant 2 : i32
    %20 = arith.addi %c2_i32, %0 : i32
    %c0_12 = arith.constant 0 : index
    %21 = arith.index_cast %20 : i32 to index
    %c0_13 = arith.constant 0 : index
    %c0_14 = arith.constant 0 : index
    %22 = vector.load %arg2[%c0_12, %21, %c0_13, %c0_14] : memref<1x16x8x40xbf16, #tpu.memory_space<vmem>>, vector<1x8x8x40xbf16>
    %23 = vector.shape_cast %22 : vector<1x8x8x40xbf16> to vector<8x8x40xbf16>
    %24 = vector.shape_cast %23 : vector<8x8x40xbf16> to vector<64x40xbf16>
    %c2 = arith.constant 2 : index
    %c0_15 = arith.constant 0 : index
    %c0_16 = arith.constant 0 : index
    %25 = vector.load %arg3[%c2, %c0_15, %c0_16] : memref<9x40x256xbf16, #tpu.memory_space<vmem>>, vector<1x40x256xbf16>
    %26 = vector.shape_cast %25 : vector<1x40x256xbf16> to vector<40x256xbf16>
    %cst_17 = arith.constant dense<0.000000e+00> : vector<64x256xf32>
    %27 = tpu.matmul %24, %26, %cst_17 {dimension_numbers = #tpu.dot_dimension_numbers<[1], [0], [0], [1], [0, 0, 1, 1], [], []>} : vector<64x40xbf16>, vector<40x256xbf16>, vector<64x256xf32> -> vector<64x256xf32>
    %28 = arith.addf %19, %27 : vector<64x256xf32>
    %c3_i32 = arith.constant 3 : i32
    %29 = arith.addi %c3_i32, %0 : i32
    %c0_18 = arith.constant 0 : index
    %30 = arith.index_cast %29 : i32 to index
    %c0_19 = arith.constant 0 : index
    %c0_20 = arith.constant 0 : index
    %31 = vector.load %arg2[%c0_18, %30, %c0_19, %c0_20] : memref<1x16x8x40xbf16, #tpu.memory_space<vmem>>, vector<1x8x8x40xbf16>
    %32 = vector.shape_cast %31 : vector<1x8x8x40xbf16> to vector<8x8x40xbf16>
    %33 = vector.shape_cast %32 : vector<8x8x40xbf16> to vector<64x40xbf16>
    %c3 = arith.constant 3 : index
    %c0_21 = arith.constant 0 : index
    %c0_22 = arith.constant 0 : index
    %34 = vector.load %arg3[%c3, %c0_21, %c0_22] : memref<9x40x256xbf16, #tpu.memory_space<vmem>>, vector<1x40x256xbf16>
    %35 = vector.shape_cast %34 : vector<1x40x256xbf16> to vector<40x256xbf16>
    %cst_23 = arith.constant dense<0.000000e+00> : vector<64x256xf32>
    %36 = tpu.matmul %33, %35, %cst_23 {dimension_numbers = #tpu.dot_dimension_numbers<[1], [0], [0], [1], [0, 0, 1, 1], [], []>} : vector<64x40xbf16>, vector<40x256xbf16>, vector<64x256xf32> -> vector<64x256xf32>
    %37 = arith.addf %28, %36 : vector<64x256xf32>
    %c4_i32 = arith.constant 4 : i32
    %38 = arith.addi %c4_i32, %0 : i32
    %c0_24 = arith.constant 0 : index
    %39 = arith.index_cast %38 : i32 to index
    %c0_25 = arith.constant 0 : index
    %c0_26 = arith.constant 0 : index
    %40 = vector.load %arg2[%c0_24, %39, %c0_25, %c0_26] : memref<1x16x8x40xbf16, #tpu.memory_space<vmem>>, vector<1x8x8x40xbf16>
    %41 = vector.shape_cast %40 : vector<1x8x8x40xbf16> to vector<8x8x40xbf16>
    %42 = vector.shape_cast %41 : vector<8x8x40xbf16> to vector<64x40xbf16>
    %c4 = arith.constant 4 : index
    %c0_27 = arith.constant 0 : index
    %c0_28 = arith.constant 0 : index
    %43 = vector.load %arg3[%c4, %c0_27, %c0_28] : memref<9x40x256xbf16, #tpu.memory_space<vmem>>, vector<1x40x256xbf16>
    %44 = vector.shape_cast %43 : vector<1x40x256xbf16> to vector<40x256xbf16>
    %cst_29 = arith.constant dense<0.000000e+00> : vector<64x256xf32>
    %45 = tpu.matmul %42, %44, %cst_29 {dimension_numbers = #tpu.dot_dimension_numbers<[1], [0], [0], [1], [0, 0, 1, 1], [], []>} : vector<64x40xbf16>, vector<40x256xbf16>, vector<64x256xf32> -> vector<64x256xf32>
    %46 = arith.addf %37, %45 : vector<64x256xf32>
    %c5_i32 = arith.constant 5 : i32
    %47 = arith.addi %c5_i32, %0 : i32
    %c0_30 = arith.constant 0 : index
    %48 = arith.index_cast %47 : i32 to index
    %c0_31 = arith.constant 0 : index
    %c0_32 = arith.constant 0 : index
    %49 = vector.load %arg2[%c0_30, %48, %c0_31, %c0_32] : memref<1x16x8x40xbf16, #tpu.memory_space<vmem>>, vector<1x8x8x40xbf16>
    %50 = vector.shape_cast %49 : vector<1x8x8x40xbf16> to vector<8x8x40xbf16>
    %51 = vector.shape_cast %50 : vector<8x8x40xbf16> to vector<64x40xbf16>
    %c5 = arith.constant 5 : index
    %c0_33 = arith.constant 0 : index
    %c0_34 = arith.constant 0 : index
    %52 = vector.load %arg3[%c5, %c0_33, %c0_34] : memref<9x40x256xbf16, #tpu.memory_space<vmem>>, vector<1x40x256xbf16>
    %53 = vector.shape_cast %52 : vector<1x40x256xbf16> to vector<40x256xbf16>
    %cst_35 = arith.constant dense<0.000000e+00> : vector<64x256xf32>
    %54 = tpu.matmul %51, %53, %cst_35 {dimension_numbers = #tpu.dot_dimension_numbers<[1], [0], [0], [1], [0, 0, 1, 1], [], []>} : vector<64x40xbf16>, vector<40x256xbf16>, vector<64x256xf32> -> vector<64x256xf32>
    %55 = arith.addf %46, %54 : vector<64x256xf32>
    %c6_i32 = arith.constant 6 : i32
    %56 = arith.addi %c6_i32, %0 : i32
    %c0_36 = arith.constant 0 : index
    %57 = arith.index_cast %56 : i32 to index
    %c0_37 = arith.constant 0 : index
    %c0_38 = arith.constant 0 : index
    %58 = vector.load %arg2[%c0_36, %57, %c0_37, %c0_38] : memref<1x16x8x40xbf16, #tpu.memory_space<vmem>>, vector<1x8x8x40xbf16>
    %59 = vector.shape_cast %58 : vector<1x8x8x40xbf16> to vector<8x8x40xbf16>
    %60 = vector.shape_cast %59 : vector<8x8x40xbf16> to vector<64x40xbf16>
    %c6 = arith.constant 6 : index
    %c0_39 = arith.constant 0 : index
    %c0_40 = arith.constant 0 : index
    %61 = vector.load %arg3[%c6, %c0_39, %c0_40] : memref<9x40x256xbf16, #tpu.memory_space<vmem>>, vector<1x40x256xbf16>
    %62 = vector.shape_cast %61 : vector<1x40x256xbf16> to vector<40x256xbf16>
    %cst_41 = arith.constant dense<0.000000e+00> : vector<64x256xf32>
    %63 = tpu.matmul %60, %62, %cst_41 {dimension_numbers = #tpu.dot_dimension_numbers<[1], [0], [0], [1], [0, 0, 1, 1], [], []>} : vector<64x40xbf16>, vector<40x256xbf16>, vector<64x256xf32> -> vector<64x256xf32>
    %64 = arith.addf %55, %63 : vector<64x256xf32>
    %c7_i32 = arith.constant 7 : i32
    %65 = arith.addi %c7_i32, %0 : i32
    %c0_42 = arith.constant 0 : index
    %66 = arith.index_cast %65 : i32 to index
    %c0_43 = arith.constant 0 : index
    %c0_44 = arith.constant 0 : index
    %67 = vector.load %arg2[%c0_42, %66, %c0_43, %c0_44] : memref<1x16x8x40xbf16, #tpu.memory_space<vmem>>, vector<1x8x8x40xbf16>
    %68 = vector.shape_cast %67 : vector<1x8x8x40xbf16> to vector<8x8x40xbf16>
    %69 = vector.shape_cast %68 : vector<8x8x40xbf16> to vector<64x40xbf16>
    %c7 = arith.constant 7 : index
    %c0_45 = arith.constant 0 : index
    %c0_46 = arith.constant 0 : index
    %70 = vector.load %arg3[%c7, %c0_45, %c0_46] : memref<9x40x256xbf16, #tpu.memory_space<vmem>>, vector<1x40x256xbf16>
    %71 = vector.shape_cast %70 : vector<1x40x256xbf16> to vector<40x256xbf16>
    %cst_47 = arith.constant dense<0.000000e+00> : vector<64x256xf32>
    %72 = tpu.matmul %69, %71, %cst_47 {dimension_numbers = #tpu.dot_dimension_numbers<[1], [0], [0], [1], [0, 0, 1, 1], [], []>} : vector<64x40xbf16>, vector<40x256xbf16>, vector<64x256xf32> -> vector<64x256xf32>
    %73 = arith.addf %64, %72 : vector<64x256xf32>
    %c8_i32_48 = arith.constant 8 : i32
    %74 = arith.addi %c8_i32_48, %0 : i32
    %c0_49 = arith.constant 0 : index
    %75 = arith.index_cast %74 : i32 to index
    %c0_50 = arith.constant 0 : index
    %c0_51 = arith.constant 0 : index
    %76 = vector.load %arg2[%c0_49, %75, %c0_50, %c0_51] : memref<1x16x8x40xbf16, #tpu.memory_space<vmem>>, vector<1x8x8x40xbf16>
    %77 = vector.shape_cast %76 : vector<1x8x8x40xbf16> to vector<8x8x40xbf16>
    %78 = vector.shape_cast %77 : vector<8x8x40xbf16> to vector<64x40xbf16>
    %c8 = arith.constant 8 : index
    %c0_52 = arith.constant 0 : index
    %c0_53 = arith.constant 0 : index
    %79 = vector.load %arg3[%c8, %c0_52, %c0_53] : memref<9x40x256xbf16, #tpu.memory_space<vmem>>, vector<1x40x256xbf16>
    %80 = vector.shape_cast %79 : vector<1x40x256xbf16> to vector<40x256xbf16>
    %cst_54 = arith.constant dense<0.000000e+00> : vector<64x256xf32>
    %81 = tpu.matmul %78, %80, %cst_54 {dimension_numbers = #tpu.dot_dimension_numbers<[1], [0], [0], [1], [0, 0, 1, 1], [], []>} : vector<64x40xbf16>, vector<40x256xbf16>, vector<64x256xf32> -> vector<64x256xf32>
    %82 = arith.addf %73, %81 : vector<64x256xf32>
    %c0_55 = arith.constant 0 : index
    %c0_56 = arith.constant 0 : index
    %83 = vector.load %arg4[%c0_55, %c0_56] : memref<1x256xf32, #tpu.memory_space<vmem>>, vector<1x256xf32>
    %84 = vector.broadcast %83 : vector<1x256xf32> to vector<64x256xf32>
    %85 = arith.addf %82, %84 : vector<64x256xf32>
    %cst_57 = arith.constant 0.000000e+00 : f32
    %86 = vector.broadcast %cst_57 : f32 to vector<64x256xf32>
    %87 = arith.maximumf %85, %86 : vector<64x256xf32>
    %c0_58 = arith.constant 0 : index
    %c0_59 = arith.constant 0 : index
    %c0_60 = arith.constant 0 : index
    %88 = vector.load %arg5[%c0_58, %c0_59, %c0_60] : memref<1x64x256xf32, #tpu.memory_space<vmem>>, vector<1x64x256xf32>
    %89 = vector.shape_cast %88 : vector<1x64x256xf32> to vector<64x256xf32>
    %90 = vector.shape_cast %87 : vector<64x256xf32> to vector<1x64x256xf32>
    tpu.vector_store %arg5[%c0_58, %c0_59, %c0_60], %90 {strides = array<i32>} : memref<1x64x256xf32, #tpu.memory_space<vmem>>, vector<1x64x256xf32>,
    return
  }
  func.func @transform_0(%arg0: i32, %arg1: i32) -> (i32, i32, i32, i32) {
    %c0_i32 = arith.constant 0 : i32
    %c0_i32_0 = arith.constant 0 : i32
    %c0_i32_1 = arith.constant 0 : i32
    %c0_i32_2 = arith.constant 0 : i32
    return %arg0, %c0_i32, %c0_i32_0, %c0_i32_1 : i32, i32, i32, i32
  }
  func.func @transform_1(%arg0: i32, %arg1: i32) -> (i32, i32, i32) {
    %c0_i32 = arith.constant 0 : i32
    %c0_i32_0 = arith.constant 0 : i32
    %c0_i32_1 = arith.constant 0 : i32
    %c0_i32_2 = arith.constant 0 : i32
    return %c0_i32, %c0_i32_0, %c0_i32_1 : i32, i32, i32
  }
  func.func @transform_2(%arg0: i32, %arg1: i32) -> (i32, i32) {
    %c0_i32 = arith.constant 0 : i32
    %c0_i32_0 = arith.constant 0 : i32
    %c0_i32_1 = arith.constant 0 : i32
    return %c0_i32, %c0_i32_0 : i32, i32
  }
  func.func @transform_3(%arg0: i32, %arg1: i32) -> (i32, i32, i32) {
    %c0_i32 = arith.constant 0 : i32
    %c0_i32_0 = arith.constant 0 : i32
    return %arg0, %arg1, %c0_i32 : i32, i32, i32
  }
}

</mosaic_0001>

<llo_original>
// kernel: conv_layer_forward.1
$region0: #{conv_layer_forward.1}
  #allocation0 [shape = 'u32[]', space=smem, size = 0x4, offset = 0x4, fixed_abs, tag = 'smem constant byte address 0x4 - core index']
  #allocation1 [shape = 'u32[72,128]{1,0:T(1,128)}', space=vmem, size = 0x9000, scoped, tag = 'internal scratch']
  %s0 = inlined_call_operand.vmem [shape: bf16[2,16,8,40], index: 0, kind: input, shape index: {}]
  %s1 = inlined_call_operand.vmem [shape: bf16[9,40,256], index: 1, kind: input, shape index: {}]
  %s2 = inlined_call_operand.vmem [shape: f32[1,256], index: 2, kind: input, shape index: {}]
  %s3 = inlined_call_operand.hbm [shape: f32[2,64,256], index: 3, kind: output, shape index: {}]
  %s4 = sld [smem:[#allocation0]]
  $region45: #{conv_layer_forward.1} parent=0
    _
  %s6 = ssub.s32 1, %s4
  %s7 = scalar_select 0, %s6, %s4
  $region1: #{conv_layer_forward.1} parent=0
    #allocation2 [shape = 'u8[131072]{0}', space=vmem, size = 0x20000, scoped, tag = 'output window, operand 0']
    #allocation3 [shape = 's32[2]{0}', space=sflag, size = 0x8, scoped, tag = 'scoped memory for conv_layer_forward.1']
    %8 = vsyncpa [#allocation3], 0
    %s9 = scalar_lea.sflag [#allocation3], 1
    %10 = vsyncpa %s9, 0
    loop: start=0, step=1, limit=4
    $region2: #{conv_layer_forward.1} parent=1 // loop_pre_header
      _
    $region3: #{conv_layer_forward.1} parent=1 // loop_header
      %s12 = sphi 0, %s16
      %p13 = scmp.ge.s32.totalorder %s12, 4
      %s19 = sphi 0, %s31
      %s20 = sphi 0, %s27
      %s21 = sphi 0, %s19
      %s22 = sphi 0, %s20
      %s23 = sphi 0, %s21
      %s24 = sphi 0, %s22
      %s34 = sphi 0, %s36
      %s37 = sphi 0, %s34
      %s38 = sphi 0, %s37
      %s54 = sphi 0, %s38
      %s58 = sphi 0, %s58
      %s60 = sphi 0, %s58
      %s61 = sphi 0, %s60
      %s75 = sphi 0, %s61
      %s79 = sphi 0, %s79
      %s81 = sphi 0, %s79
      %s82 = sphi 0, %s81
      %s96 = sphi 0, %s82
      %s104 = sphi 0, %s106
      %s107 = sphi 0, %s104
      %s108 = sphi 0, %s107
      %s124 = sphi 0, %s108
    $region4: #{conv_layer_forward.1} parent=1 // loop_header_branch
      %15 = sbr.rel (%p13) target = $region8
    $region5: #{conv_layer_forward.1} parent=1 // loop_body
      %s17 = ssub.s32 %s12, 1
      %s18 = ssub.s32 %s12, 2
      %s25 = sadd.s32 1, %s20
      %p26 = scmp.ge.s32.totalorder %s25, 1
      %s27 = scalar_select %p26, 0, %s25
      %s28 = sadd.s32 1, %s19
      %s29 = scalar_select %p26, %s28, %s19
      %p30 = scmp.ge.s32.totalorder %s29, 2
      %s31 = scalar_select %p30, 0, %s29
      %s32 = ssub.s32 %s19, %s31
      %p33 = scmp.eq.s32.totalorder %s32, 0
      %s35 = sadd.s32 %s34, 1
      %s36 = scalar_select %p33, %s34, %s35
      %p39 = pneg %p33
      %p40 = scmp.eq.s32.totalorder %s12, 1
      %p41 = por %p39, %p40
      %p42 = scmp.ne.s32.totalorder %s34, %s37
      %p43 = scmp.eq.s32.totalorder %s12, 0
      %p44 = por %p42, %p43
      %p45 = scmp.ne.s32.totalorder %s34, %s37
      %p46 = scmp.eq.s32.totalorder %s17, 1
      %p47 = por %p45, %p46
      %p48 = scmp.ne.s32.totalorder %s37, %s38
      %p49 = scmp.eq.s32.totalorder %s17, 0
      %p50 = por %p48, %p49
      %p51 = scmp.ne.s32.totalorder %s37, %s38
      %p52 = scmp.eq.s32.totalorder %s18, 1
      %p53 = por %p51, %p52
      %p55 = scmp.ne.s32.totalorder %s38, %s54
      %p56 = scmp.eq.s32.totalorder %s18, 0
      %p57 = por %p55, %p56
      %s59 = sadd.s32 %s58, 1
      %p62 = scmp.eq.s32.totalorder %s12, 1
      %p63 = scmp.ne.s32.totalorder %s58, %s60
      %p64 = scmp.eq.s32.totalorder %s12, 0
      %p65 = por %p63, %p64
      %p66 = scmp.ne.s32.totalorder %s58, %s60
      %p67 = scmp.eq.s32.totalorder %s17, 1
      %p68 = por %p66, %p67
      %p69 = scmp.ne.s32.totalorder %s60, %s61
      %p70 = scmp.eq.s32.totalorder %s17, 0
      %p71 = por %p69, %p70
      %p72 = scmp.ne.s32.totalorder %s60, %s61
      %p73 = scmp.eq.s32.totalorder %s18, 1
      %p74 = por %p72, %p73
      %p76 = scmp.ne.s32.totalorder %s61, %s75
      %p77 = scmp.eq.s32.totalorder %s18, 0
      %p78 = por %p76, %p77
      %s80 = sadd.s32 %s79, 1
      %p83 = scmp.eq.s32.totalorder %s12, 1
      %p84 = scmp.ne.s32.totalorder %s79, %s81
      %p85 = scmp.eq.s32.totalorder %s12, 0
      %p86 = por %p84, %p85
      %p87 = scmp.ne.s32.totalorder %s79, %s81
      %p88 = scmp.eq.s32.totalorder %s17, 1
      %p89 = por %p87, %p88
      %p90 = scmp.ne.s32.totalorder %s81, %s82
      %p91 = scmp.eq.s32.totalorder %s17, 0
      %p92 = por %p90, %p91
      %p93 = scmp.ne.s32.totalorder %s81, %s82
      %p94 = scmp.eq.s32.totalorder %s18, 1
      %p95 = por %p93, %p94
      %p97 = scmp.ne.s32.totalorder %s82, %s96
      %p98 = scmp.eq.s32.totalorder %s18, 0
      %p99 = por %p97, %p98
      %s100 = ssub.s32 %s19, %s31
      %s101 = ssub.s32 %s20, %s27
      %s102 = sor.u32 %s100, %s101
      %p103 = scmp.eq.s32.totalorder %s102, 0
      %s105 = sadd.s32 %s104, 1
      %s106 = scalar_select %p103, %s104, %s105
      %p109 = pneg %p103
      %p110 = scmp.eq.s32.totalorder %s12, 1
      %p111 = por %p109, %p110
      %p112 = scmp.ne.s32.totalorder %s104, %s107
      %p113 = scmp.eq.s32.totalorder %s12, 0
      %p114 = por %p112, %p113
      %p115 = scmp.ne.s32.totalorder %s104, %s107
      %p116 = scmp.eq.s32.totalorder %s17, 1
      %p117 = por %p115, %p116
      %p118 = scmp.ne.s32.totalorder %s107, %s108
      %p119 = scmp.eq.s32.totalorder %s17, 0
      %p120 = por %p118, %p119
      %p121 = scmp.ne.s32.totalorder %s107, %s108
      %p122 = scmp.eq.s32.totalorder %s18, 1
      %p123 = por %p121, %p122
      %p125 = scmp.ne.s32.totalorder %s108, %s124
      %p126 = scmp.eq.s32.totalorder %s18, 0
      %p127 = por %p125, %p126
      %p128 = scmp.le.s32.totalorder 1, %s12
      %p129 = scmp.lt.s32.totalorder %s12, 3
      %p130 = pnand %p128, %p129
      %p131 = pneg %p130
      // Predicated region
      $region9: #{conv_layer_forward.1} parent=5 // pred_check
        _
      $region10: #{conv_layer_forward.1} parent=5 // pred_check_branch
        %133 = sbr.rel (%p130) target = $region12
      $region11: #{conv_layer_forward.1} parent=5 // pred_region
        %s134 = ssub.s32 %s12, 1
        // Predicated region
        $region13: #{conv_layer_forward.1} parent=11 // pred_check
          %p135 = pneg %p71
        $region14: #{conv_layer_forward.1} parent=11 // pred_check_branch
          %137 = sbr.rel (%p135) target = $region16
        $region15: #{conv_layer_forward.1} parent=11 // pred_region
          _
        $region16: #{conv_layer_forward.1} parent=11 // pred_fallthru
          _
        // Predicated region
        $region17: #{conv_layer_forward.1} parent=11 // pred_check
          %p138 = pneg %p92
        $region18: #{conv_layer_forward.1} parent=11 // pred_check_branch
          %140 = sbr.rel (%p138) target = $region20
        $region19: #{conv_layer_forward.1} parent=11 // pred_region
          _
        $region20: #{conv_layer_forward.1} parent=11 // pred_fallthru
          _
      $region12: #{conv_layer_forward.1} parent=5 // pred_fallthru
        _
      %p141 = scmp.lt.s32.totalorder %s12, 2
      // Predicated region
      $region21: #{conv_layer_forward.1} parent=5 // pred_check
        %p142 = pneg %p141
      $region22: #{conv_layer_forward.1} parent=5 // pred_check_branch
        %144 = sbr.rel (%p142) target = $region24
      $region23: #{conv_layer_forward.1} parent=5 // pred_region
        // Predicated region
        $region25: #{conv_layer_forward.1} parent=23 // pred_check
          %p145 = pneg %p44
        $region26: #{conv_layer_forward.1} parent=23 // pred_check_branch
          %147 = sbr.rel (%p145) target = $region28
        $region27: #{conv_layer_forward.1} parent=23 // pred_region
          %p148 = scmp.lt.s32.totalorder %s19, 1
          %s149 = scalar_select %p148, %s19, 1
          %s150 = smul.addr %s149, 16
          %s151 = smul.addr %s150, 4
          %s152 = scalar_lea.vmem %s0, %s151
        $region28: #{conv_layer_forward.1} parent=23 // pred_fallthru
          _
      $region24: #{conv_layer_forward.1} parent=5 // pred_fallthru
        _
      %p153 = scmp.le.s32.totalorder 1, %s12
      %p154 = scmp.lt.s32.totalorder %s12, 3
      %p155 = pnand %p153, %p154
      %p156 = pneg %p155
      // Predicated region
      $region29: #{conv_layer_forward.1} parent=5 // pred_check
        _
      $region30: #{conv_layer_forward.1} parent=5 // pred_check_branch
        %158 = sbr.rel (%p155) target = $region32
      $region31: #{conv_layer_forward.1} parent=5 // pred_region
        %s159 = ssub.s32 %s12, 1
        %p160 = scmp.lt.s32.totalorder %s21, 1
        %s161 = scalar_select %p160, %s21, 1
        %s162 = smul.addr %s161, 16
        %s163 = smul.addr %s162, 4
        %s164 = scalar_lea.vmem %s0, %s163
        %p165 = pneg %p50
        %p166 = pneg %p47
        %p167 = pneg %p71
        %p168 = pneg %p68
        %p169 = pneg %p92
        %p170 = pneg %p89
        %p171 = pneg %p120
        %p172 = pneg %p117
        %s173 = sand.u32 %s107, 1
        %s174 = scalar_lea.sflag [#allocation3], %s173
        %s175 = sand.u32 %s107, 1
        %s176 = smul.addr %s175, 128
        %s177 = scalar_lea.vmem [#allocation2], %s176
        %p178 = scmp.lt.s32.totalorder %s21, 1
        %s179 = scalar_select %p178, %s21, 1
        %s180 = smul.addr %s179, 16
        %s181 = smul.addr %s180, 4
        %s182 = scalar_lea.vmem %s0, %s181
        %s183 = smul.u32 8, %s22
        %s185 = smul.u32 %s22, 8
        %s186 = smul.addr %s185, 4
        %s187 = scalar_lea.vmem %s182, %s186
        %v188 = vld [vmem:[%s187] sm:$0xf]
        %v189 = vld [vmem:[%s187 + $0x4] sm:$0xf]
        %v190 = vld [vmem:[%s187 + $0x8] sm:$0xf]
        %v191 = vld [vmem:[%s187 + $0xc] sm:$0xf]
        %v192 = vld [vmem:[%s187 + $0x10] sm:$0xf]
        %v193 = vld [vmem:[%s187 + $0x14] sm:$0xf]
        %v194 = vld [vmem:[%s187 + $0x18] sm:$0xf]
        %v195 = vld [vmem:[%s187 + $0x1c] sm:$0xf]
        %v196 = vld [vmem:[%s1] sm:$0xff]
        %v197 = vld [vmem:[%s1 + $0x8] sm:$0xff]
        %v198 = vld [vmem:[%s1 + $0x10] sm:$0xff]
        %v199 = vld [vmem:[%s1 + $0x18] sm:$0xff]
        %v200 = vld [vmem:[%s1 + $0x20] sm:$0xff]
        %s201 = sadd.s32 %s185, 1
        %s202 = smul.addr %s201, 4
        %s203 = scalar_lea.vmem %s182, %s202
        %v204 = vld [vmem:[%s203] sm:$0xf]
        %v205 = vld [vmem:[%s203 + $0x4] sm:$0xf]
        %v206 = vld [vmem:[%s203 + $0x8] sm:$0xf]
        %v207 = vld [vmem:[%s203 + $0xc] sm:$0xf]
        %v208 = vld [vmem:[%s203 + $0x10] sm:$0xf]
        %v209 = vld [vmem:[%s203 + $0x14] sm:$0xf]
        %v210 = vld [vmem:[%s203 + $0x18] sm:$0xf]
        %v211 = vld [vmem:[%s203 + $0x1c] sm:$0xf]
        %s212 = scalar_lea.vmem %s1, 40
        %v213 = vld [vmem:[%s212] sm:$0xff]
        %v214 = vld [vmem:[%s212 + $0x8] sm:$0xff]
        %v215 = vld [vmem:[%s212 + $0x10] sm:$0xff]
        %v216 = vld [vmem:[%s212 + $0x18] sm:$0xff]
        %v217 = vld [vmem:[%s212 + $0x20] sm:$0xff]
        %v226 = vunpack.c.l.b16 %v204
        %v227 = vunpack.c.l.b16 %v205
        %v228 = vunpack.c.l.b16 %v206
        %v229 = vunpack.c.l.b16 %v207
        %v230 = vunpack.c.l.b16 %v208
        %v231 = vunpack.c.l.b16 %v209
        %v232 = vunpack.c.l.b16 %v210
        %v233 = vunpack.c.l.b16 %v211
        %v234 = vpack.c.b16 %v227, %v226
        %v235 = vpack.c.b16 %v229, %v228
        %v236 = vpack.c.b16 %v231, %v230
        %v237 = vpack.c.b16 %v233, %v232
        %v243 = vunpack.c.l.b16 %v213
        %v244 = vunpack.c.h.b16 %v213
        %v245 = vunpack.c.l.b16 %v214
        %v246 = vunpack.c.h.b16 %v214
        %v247 = vunpack.c.l.b16 %v215
        %v248 = vunpack.c.h.b16 %v215
        %v249 = vunpack.c.l.b16 %v216
        %v250 = vunpack.c.h.b16 %v216
        %v251 = vunpack.c.l.b16 %v217
        %v252 = vunpack.c.h.b16 %v217
        %v253 = vpack.c.b16 %v245, %v243
        %v254 = vpack.c.b16 %v246, %v244
        %v255 = vpack.c.b16 %v249, %v247
        %v256 = vpack.c.b16 %v250, %v248
        %v257 = vpack.c.b16 %v251, %v251
        %v258 = vpack.c.b16 %v252, %v252
        %vm263 = vcmask 326656
        %v265 = vsel %vm263, %v234, 0
        %v268 = vsel %vm263, %v235, 0
        %v271 = vsel %vm263, %v236, 0
        %v274 = vsel %vm263, %v237, 0
        %vm276 = vcmask 1043456
        %v278 = vsel %vm276, %v257, 0
        %v281 = vsel %vm276, %v258, 0
        %283 = vmatpush.bf16.msra.mxu0 0
        %284 = vmatpush.bf16.msra.mxu0 0
        %285 = vmatpush.bf16.msra.mxu0 0
        %286 = vmatpush.bf16.msra.mxu0 0
        %287 = vmatpush.bf16.msra.mxu0 0
        %288 = vmatpush.bf16.msra.mxu0 %v278
        %289 = vmatpush.bf16.msra.mxu0 %v255
        %290 = vmatpush.bf16.msra.mxu0 %v253
        %291 = vmatmul.bf16.gmra.mxu0 %v265
        %v292 = vpop.f32.mrf.mxu0
        %v293 = vadd.f32 0.0, %v292
        %v294 = vpop.f32.mrf.mxu0
        %v295 = vadd.f32 0.0, %v294
        %296 = vmatmul.bf16.gmra.mxu0 %v268
        %v297 = vpop.f32.mrf.mxu0
        %v298 = vadd.f32 0.0, %v297
        %v299 = vpop.f32.mrf.mxu0
        %v300 = vadd.f32 0.0, %v299
        %301 = vmatmul.bf16.gmra.mxu0 %v271
        %v302 = vpop.f32.mrf.mxu0
        %v303 = vadd.f32 0.0, %v302
        %v304 = vpop.f32.mrf.mxu0
        %v305 = vadd.f32 0.0, %v304
        %306 = vmatmul.bf16.gmra.mxu0 %v274
        %v307 = vpop.f32.mrf.mxu0
        %v308 = vadd.f32 0.0, %v307
        %v309 = vpop.f32.mrf.mxu0
        %v310 = vadd.f32 0.0, %v309
        %311 = vdwg.mxu0
        %312 = vmatpush.bf16.msra.mxu0 0
        %313 = vmatpush.bf16.msra.mxu0 0
        %314 = vmatpush.bf16.msra.mxu0 0
        %315 = vmatpush.bf16.msra.mxu0 0
        %316 = vmatpush.bf16.msra.mxu0 0
        %317 = vmatpush.bf16.msra.mxu0 %v281
        %318 = vmatpush.bf16.msra.mxu0 %v256
        %319 = vmatpush.bf16.msra.mxu0 %v254
        %320 = vmatmul.bf16.gmra.mxu0 %v265
        %v321 = vpop.f32.mrf.mxu0
        %v322 = vadd.f32 0.0, %v321
        %v323 = vpop.f32.mrf.mxu0
        %v324 = vadd.f32 0.0, %v323
        %325 = vmatmul.bf16.gmra.mxu0 %v268
        %v326 = vpop.f32.mrf.mxu0
        %v327 = vadd.f32 0.0, %v326
        %v328 = vpop.f32.mrf.mxu0
        %v329 = vadd.f32 0.0, %v328
        %330 = vmatmul.bf16.gmra.mxu0 %v271
        %v331 = vpop.f32.mrf.mxu0
        %v332 = vadd.f32 0.0, %v331
        %v333 = vpop.f32.mrf.mxu0
        %v334 = vadd.f32 0.0, %v333
        %335 = vmatmul.bf16.gmra.mxu0 %v274
        %v336 = vpop.f32.mrf.mxu0
        %v337 = vadd.f32 0.0, %v336
        %v338 = vpop.f32.mrf.mxu0
        %v339 = vadd.f32 0.0, %v338
        %340 = vdwg.mxu0
        %v349 = vunpack.c.l.b16 %v188
        %v350 = vunpack.c.l.b16 %v189
        %v351 = vunpack.c.l.b16 %v190
        %v352 = vunpack.c.l.b16 %v191
        %v353 = vunpack.c.l.b16 %v192
        %v354 = vunpack.c.l.b16 %v193
        %v355 = vunpack.c.l.b16 %v194
        %v356 = vunpack.c.l.b16 %v195
        %v357 = vpack.c.b16 %v350, %v349
        %v358 = vpack.c.b16 %v352, %v351
        %v359 = vpack.c.b16 %v354, %v353
        %v360 = vpack.c.b16 %v356, %v355
        %v366 = vunpack.c.l.b16 %v196
        %v367 = vunpack.c.h.b16 %v196
        %v368 = vunpack.c.l.b16 %v197
        %v369 = vunpack.c.h.b16 %v197
        %v370 = vunpack.c.l.b16 %v198
        %v371 = vunpack.c.h.b16 %v198
        %v372 = vunpack.c.l.b16 %v199
        %v373 = vunpack.c.h.b16 %v199
        %v374 = vunpack.c.l.b16 %v200
        %v375 = vunpack.c.h.b16 %v200
        %v376 = vpack.c.b16 %v368, %v366
        %v377 = vpack.c.b16 %v369, %v367
        %v378 = vpack.c.b16 %v372, %v370
        %v379 = vpack.c.b16 %v373, %v371
        %v380 = vpack.c.b16 %v374, %v374
        %v381 = vpack.c.b16 %v375, %v375
        %v387 = vsel %vm263, %v357, 0
        %v390 = vsel %vm263, %v358, 0
        %v393 = vsel %vm263, %v359, 0
        %v396 = vsel %vm263, %v360, 0
        %v399 = vsel %vm276, %v380, 0
        %v402 = vsel %vm276, %v381, 0
        %404 = vmatpush.bf16.msra.mxu0 0
        %405 = vmatpush.bf16.msra.mxu0 0
        %406 = vmatpush.bf16.msra.mxu0 0
        %407 = vmatpush.bf16.msra.mxu0 0
        %408 = vmatpush.bf16.msra.mxu0 0
        %409 = vmatpush.bf16.msra.mxu0 %v399
        %410 = vmatpush.bf16.msra.mxu0 %v378
        %411 = vmatpush.bf16.msra.mxu0 %v376
        %412 = vmatmul.bf16.gmra.mxu0 %v387
        %v413 = vpop.f32.mrf.mxu0
        %v414 = vadd.f32 %v293, %v413
        %v415 = vpop.f32.mrf.mxu0
        %v416 = vadd.f32 %v295, %v415
        %417 = vmatmul.bf16.gmra.mxu0 %v390
        %v418 = vpop.f32.mrf.mxu0
        %v419 = vadd.f32 %v298, %v418
        %v420 = vpop.f32.mrf.mxu0
        %v421 = vadd.f32 %v300, %v420
        %422 = vmatmul.bf16.gmra.mxu0 %v393
        %v423 = vpop.f32.mrf.mxu0
        %v424 = vadd.f32 %v303, %v423
        %v425 = vpop.f32.mrf.mxu0
        %v426 = vadd.f32 %v305, %v425
        %427 = vmatmul.bf16.gmra.mxu0 %v396
        %v428 = vpop.f32.mrf.mxu0
        %v429 = vadd.f32 %v308, %v428
        %v430 = vpop.f32.mrf.mxu0
        %v431 = vadd.f32 %v310, %v430
        %432 = vdwg.mxu0
        %433 = vmatpush.bf16.msra.mxu0 0
        %434 = vmatpush.bf16.msra.mxu0 0
        %435 = vmatpush.bf16.msra.mxu0 0
        %436 = vmatpush.bf16.msra.mxu0 0
        %437 = vmatpush.bf16.msra.mxu0 0
        %438 = vmatpush.bf16.msra.mxu0 %v402
        %439 = vmatpush.bf16.msra.mxu0 %v379
        %440 = vmatpush.bf16.msra.mxu0 %v377
        %441 = vmatmul.bf16.gmra.mxu0 %v387
        %v442 = vpop.f32.mrf.mxu0
        %v443 = vadd.f32 %v322, %v442
        %v444 = vpop.f32.mrf.mxu0
        %v445 = vadd.f32 %v324, %v444
        %446 = vmatmul.bf16.gmra.mxu0 %v390
        %v447 = vpop.f32.mrf.mxu0
        %v448 = vadd.f32 %v327, %v447
        %v449 = vpop.f32.mrf.mxu0
        %v450 = vadd.f32 %v329, %v449
        %451 = vmatmul.bf16.gmra.mxu0 %v393
        %v452 = vpop.f32.mrf.mxu0
        %v453 = vadd.f32 %v332, %v452
        %v454 = vpop.f32.mrf.mxu0
        %v455 = vadd.f32 %v334, %v454
        %456 = vmatmul.bf16.gmra.mxu0 %v396
        %v457 = vpop.f32.mrf.mxu0
        %v458 = vadd.f32 %v337, %v457
        %v459 = vpop.f32.mrf.mxu0
        %v460 = vadd.f32 %v339, %v459
        %461 = vdwg.mxu0
        %s462 = sadd.s32 %s185, 2
        %s463 = smul.addr %s462, 4
        %s464 = scalar_lea.vmem %s182, %s463
        %v465 = vld [vmem:[%s464] sm:$0xf]
        %v466 = vld [vmem:[%s464 + $0x4] sm:$0xf]
        %v467 = vld [vmem:[%s464 + $0x8] sm:$0xf]
        %v468 = vld [vmem:[%s464 + $0xc] sm:$0xf]
        %v469 = vld [vmem:[%s464 + $0x10] sm:$0xf]
        %v470 = vld [vmem:[%s464 + $0x14] sm:$0xf]
        %v471 = vld [vmem:[%s464 + $0x18] sm:$0xf]
        %v472 = vld [vmem:[%s464 + $0x1c] sm:$0xf]
        %s473 = scalar_lea.vmem %s1, 80
        %v474 = vld [vmem:[%s473] sm:$0xff]
        %v475 = vld [vmem:[%s473 + $0x8] sm:$0xff]
        %v476 = vld [vmem:[%s473 + $0x10] sm:$0xff]
        %v477 = vld [vmem:[%s473 + $0x18] sm:$0xff]
        %v478 = vld [vmem:[%s473 + $0x20] sm:$0xff]
        %v487 = vunpack.c.l.b16 %v465
        %v488 = vunpack.c.l.b16 %v466
        %v489 = vunpack.c.l.b16 %v467
        %v490 = vunpack.c.l.b16 %v468
        %v491 = vunpack.c.l.b16 %v469
        %v492 = vunpack.c.l.b16 %v470
        %v493 = vunpack.c.l.b16 %v471
        %v494 = vunpack.c.l.b16 %v472
        %v495 = vpack.c.b16 %v488, %v487
        %v496 = vpack.c.b16 %v490, %v489
        %v497 = vpack.c.b16 %v492, %v491
        %v498 = vpack.c.b16 %v494, %v493
        %v504 = vunpack.c.l.b16 %v474
        %v505 = vunpack.c.h.b16 %v474
        %v506 = vunpack.c.l.b16 %v475
        %v507 = vunpack.c.h.b16 %v475
        %v508 = vunpack.c.l.b16 %v476
        %v509 = vunpack.c.h.b16 %v476
        %v510 = vunpack.c.l.b16 %v477
        %v511 = vunpack.c.h.b16 %v477
        %v512 = vunpack.c.l.b16 %v478
        %v513 = vunpack.c.h.b16 %v478
        %v514 = vpack.c.b16 %v506, %v504
        %v515 = vpack.c.b16 %v507, %v505
        %v516 = vpack.c.b16 %v510, %v508
        %v517 = vpack.c.b16 %v511, %v509
        %v518 = vpack.c.b16 %v512, %v512
        %v519 = vpack.c.b16 %v513, %v513
        %v525 = vsel %vm263, %v495, 0
        %v528 = vsel %vm263, %v496, 0
        %v531 = vsel %vm263, %v497, 0
        %v534 = vsel %vm263, %v498, 0
        %v537 = vsel %vm276, %v518, 0
        %v540 = vsel %vm276, %v519, 0
        %542 = vmatpush.bf16.msra.mxu0 0
        %543 = vmatpush.bf16.msra.mxu0 0
        %544 = vmatpush.bf16.msra.mxu0 0
        %545 = vmatpush.bf16.msra.mxu0 0
        %546 = vmatpush.bf16.msra.mxu0 0
        %547 = vmatpush.bf16.msra.mxu0 %v537
        %548 = vmatpush.bf16.msra.mxu0 %v516
        %549 = vmatpush.bf16.msra.mxu0 %v514
        %550 = vmatmul.bf16.gmra.mxu0 %v525
        %v551 = vpop.f32.mrf.mxu0
        %v552 = vadd.f32 0.0, %v551
        %v553 = vpop.f32.mrf.mxu0
        %v554 = vadd.f32 0.0, %v553
        %555 = vmatmul.bf16.gmra.mxu0 %v528
        %v556 = vpop.f32.mrf.mxu0
        %v557 = vadd.f32 0.0, %v556
        %v558 = vpop.f32.mrf.mxu0
        %v559 = vadd.f32 0.0, %v558
        %560 = vmatmul.bf16.gmra.mxu0 %v531
        %v561 = vpop.f32.mrf.mxu0
        %v562 = vadd.f32 0.0, %v561
        %v563 = vpop.f32.mrf.mxu0
        %v564 = vadd.f32 0.0, %v563
        %565 = vmatmul.bf16.gmra.mxu0 %v534
        %v566 = vpop.f32.mrf.mxu0
        %v567 = vadd.f32 0.0, %v566
        %v568 = vpop.f32.mrf.mxu0
        %v569 = vadd.f32 0.0, %v568
        %570 = vdwg.mxu0
        %571 = vmatpush.bf16.msra.mxu0 0
        %572 = vmatpush.bf16.msra.mxu0 0
        %573 = vmatpush.bf16.msra.mxu0 0
        %574 = vmatpush.bf16.msra.mxu0 0
        %575 = vmatpush.bf16.msra.mxu0 0
        %576 = vmatpush.bf16.msra.mxu0 %v540
        %577 = vmatpush.bf16.msra.mxu0 %v517
        %578 = vmatpush.bf16.msra.mxu0 %v515
        %579 = vmatmul.bf16.gmra.mxu0 %v525
        %v580 = vpop.f32.mrf.mxu0
        %v581 = vadd.f32 0.0, %v580
        %v582 = vpop.f32.mrf.mxu0
        %v583 = vadd.f32 0.0, %v582
        %584 = vmatmul.bf16.gmra.mxu0 %v528
        %v585 = vpop.f32.mrf.mxu0
        %v586 = vadd.f32 0.0, %v585
        %v587 = vpop.f32.mrf.mxu0
        %v588 = vadd.f32 0.0, %v587
        %589 = vmatmul.bf16.gmra.mxu0 %v531
        %v590 = vpop.f32.mrf.mxu0
        %v591 = vadd.f32 0.0, %v590
        %v592 = vpop.f32.mrf.mxu0
        %v593 = vadd.f32 0.0, %v592
        %594 = vmatmul.bf16.gmra.mxu0 %v534
        %v595 = vpop.f32.mrf.mxu0
        %v596 = vadd.f32 0.0, %v595
        %v597 = vpop.f32.mrf.mxu0
        %v598 = vadd.f32 0.0, %v597
        %599 = vdwg.mxu0
        %v600 = vadd.f32 %v414, %v552
        %v601 = vadd.f32 %v443, %v581
        %v602 = vadd.f32 %v416, %v554
        %v603 = vadd.f32 %v445, %v583
        %v604 = vadd.f32 %v419, %v557
        %v605 = vadd.f32 %v448, %v586
        %v606 = vadd.f32 %v421, %v559
        %v607 = vadd.f32 %v450, %v588
        %v608 = vadd.f32 %v424, %v562
        %v609 = vadd.f32 %v453, %v591
        %v610 = vadd.f32 %v426, %v564
        %v611 = vadd.f32 %v455, %v593
        %v612 = vadd.f32 %v429, %v567
        %v613 = vadd.f32 %v458, %v596
        %v614 = vadd.f32 %v431, %v569
        %v615 = vadd.f32 %v460, %v598
        %s616 = sadd.s32 %s185, 3
        %s617 = smul.addr %s616, 4
        %s618 = scalar_lea.vmem %s182, %s617
        %v619 = vld [vmem:[%s618] sm:$0xf]
        %v620 = vld [vmem:[%s618 + $0x4] sm:$0xf]
        %v621 = vld [vmem:[%s618 + $0x8] sm:$0xf]
        %v622 = vld [vmem:[%s618 + $0xc] sm:$0xf]
        %v623 = vld [vmem:[%s618 + $0x10] sm:$0xf]
        %v624 = vld [vmem:[%s618 + $0x14] sm:$0xf]
        %v625 = vld [vmem:[%s618 + $0x18] sm:$0xf]
        %v626 = vld [vmem:[%s618 + $0x1c] sm:$0xf]
        %s627 = scalar_lea.vmem %s1, 120
        %v628 = vld [vmem:[%s627] sm:$0xff]
        %v629 = vld [vmem:[%s627 + $0x8] sm:$0xff]
        %v630 = vld [vmem:[%s627 + $0x10] sm:$0xff]
        %v631 = vld [vmem:[%s627 + $0x18] sm:$0xff]
        %v632 = vld [vmem:[%s627 + $0x20] sm:$0xff]
        %v641 = vunpack.c.l.b16 %v619
        %v642 = vunpack.c.l.b16 %v620
        %v643 = vunpack.c.l.b16 %v621
        %v644 = vunpack.c.l.b16 %v622
        %v645 = vunpack.c.l.b16 %v623
        %v646 = vunpack.c.l.b16 %v624
        %v647 = vunpack.c.l.b16 %v625
        %v648 = vunpack.c.l.b16 %v626
        %v649 = vpack.c.b16 %v642, %v641
        %v650 = vpack.c.b16 %v644, %v643
        %v651 = vpack.c.b16 %v646, %v645
        %v652 = vpack.c.b16 %v648, %v647
        %v658 = vunpack.c.l.b16 %v628
        %v659 = vunpack.c.h.b16 %v628
        %v660 = vunpack.c.l.b16 %v629
        %v661 = vunpack.c.h.b16 %v629
        %v662 = vunpack.c.l.b16 %v630
        %v663 = vunpack.c.h.b16 %v630
        %v664 = vunpack.c.l.b16 %v631
        %v665 = vunpack.c.h.b16 %v631
        %v666 = vunpack.c.l.b16 %v632
        %v667 = vunpack.c.h.b16 %v632
        %v668 = vpack.c.b16 %v660, %v658
        %v669 = vpack.c.b16 %v661, %v659
        %v670 = vpack.c.b16 %v664, %v662
        %v671 = vpack.c.b16 %v665, %v663
        %v672 = vpack.c.b16 %v666, %v666
        %v673 = vpack.c.b16 %v667, %v667
        %v679 = vsel %vm263, %v649, 0
        %v682 = vsel %vm263, %v650, 0
        %v685 = vsel %vm263, %v651, 0
        %v688 = vsel %vm263, %v652, 0
        %v691 = vsel %vm276, %v672, 0
        %v694 = vsel %vm276, %v673, 0
        %696 = vmatpush.bf16.msra.mxu0 0
        %697 = vmatpush.bf16.msra.mxu0 0
        %698 = vmatpush.bf16.msra.mxu0 0
        %699 = vmatpush.bf16.msra.mxu0 0
        %700 = vmatpush.bf16.msra.mxu0 0
        %701 = vmatpush.bf16.msra.mxu0 %v691
        %702 = vmatpush.bf16.msra.mxu0 %v670
        %703 = vmatpush.bf16.msra.mxu0 %v668
        %704 = vmatmul.bf16.gmra.mxu0 %v679
        %v705 = vpop.f32.mrf.mxu0
        %v706 = vadd.f32 0.0, %v705
        %v707 = vpop.f32.mrf.mxu0
        %v708 = vadd.f32 0.0, %v707
        %709 = vmatmul.bf16.gmra.mxu0 %v682
        %v710 = vpop.f32.mrf.mxu0
        %v711 = vadd.f32 0.0, %v710
        %v712 = vpop.f32.mrf.mxu0
        %v713 = vadd.f32 0.0, %v712
        %714 = vmatmul.bf16.gmra.mxu0 %v685
        %v715 = vpop.f32.mrf.mxu0
        %v716 = vadd.f32 0.0, %v715
        %v717 = vpop.f32.mrf.mxu0
        %v718 = vadd.f32 0.0, %v717
        %719 = vmatmul.bf16.gmra.mxu0 %v688
        %v720 = vpop.f32.mrf.mxu0
        %v721 = vadd.f32 0.0, %v720
        %v722 = vpop.f32.mrf.mxu0
        %v723 = vadd.f32 0.0, %v722
        %724 = vdwg.mxu0
        %725 = vmatpush.bf16.msra.mxu0 0
        %726 = vmatpush.bf16.msra.mxu0 0
        %727 = vmatpush.bf16.msra.mxu0 0
        %728 = vmatpush.bf16.msra.mxu0 0
        %729 = vmatpush.bf16.msra.mxu0 0
        %730 = vmatpush.bf16.msra.mxu0 %v694
        %731 = vmatpush.bf16.msra.mxu0 %v671
        %732 = vmatpush.bf16.msra.mxu0 %v669
        %733 = vmatmul.bf16.gmra.mxu0 %v679
        %v734 = vpop.f32.mrf.mxu0
        %v735 = vadd.f32 0.0, %v734
        %v736 = vpop.f32.mrf.mxu0
        %v737 = vadd.f32 0.0, %v736
        %738 = vmatmul.bf16.gmra.mxu0 %v682
        %v739 = vpop.f32.mrf.mxu0
        %v740 = vadd.f32 0.0, %v739
        %v741 = vpop.f32.mrf.mxu0
        %v742 = vadd.f32 0.0, %v741
        %743 = vmatmul.bf16.gmra.mxu0 %v685
        %v744 = vpop.f32.mrf.mxu0
        %v745 = vadd.f32 0.0, %v744
        %v746 = vpop.f32.mrf.mxu0
        %v747 = vadd.f32 0.0, %v746
        %748 = vmatmul.bf16.gmra.mxu0 %v688
        %v749 = vpop.f32.mrf.mxu0
        %v750 = vadd.f32 0.0, %v749
        %v751 = vpop.f32.mrf.mxu0
        %v752 = vadd.f32 0.0, %v751
        %753 = vdwg.mxu0
        %v754 = vadd.f32 %v600, %v706
        %v755 = vadd.f32 %v601, %v735
        %v756 = vadd.f32 %v602, %v708
        %v757 = vadd.f32 %v603, %v737
        %v758 = vadd.f32 %v604, %v711
        %v759 = vadd.f32 %v605, %v740
        %v760 = vadd.f32 %v606, %v713
        %v761 = vadd.f32 %v607, %v742
        %v762 = vadd.f32 %v608, %v716
        %v763 = vadd.f32 %v609, %v745
        %v764 = vadd.f32 %v610, %v718
        %v765 = vadd.f32 %v611, %v747
        %v766 = vadd.f32 %v612, %v721
        %v767 = vadd.f32 %v613, %v750
        %v768 = vadd.f32 %v614, %v723
        %v769 = vadd.f32 %v615, %v752
        %s770 = sadd.s32 %s185, 4
        %s771 = smul.addr %s770, 4
        %s772 = scalar_lea.vmem %s182, %s771
        %v773 = vld [vmem:[%s772] sm:$0xf]
        %v774 = vld [vmem:[%s772 + $0x4] sm:$0xf]
        %v775 = vld [vmem:[%s772 + $0x8] sm:$0xf]
        %v776 = vld [vmem:[%s772 + $0xc] sm:$0xf]
        %v777 = vld [vmem:[%s772 + $0x10] sm:$0xf]
        %v778 = vld [vmem:[%s772 + $0x14] sm:$0xf]
        %v779 = vld [vmem:[%s772 + $0x18] sm:$0xf]
        %v780 = vld [vmem:[%s772 + $0x1c] sm:$0xf]
        %s781 = scalar_lea.vmem %s1, 160
        %v782 = vld [vmem:[%s781] sm:$0xff]
        %v783 = vld [vmem:[%s781 + $0x8] sm:$0xff]
        %v784 = vld [vmem:[%s781 + $0x10] sm:$0xff]
        %v785 = vld [vmem:[%s781 + $0x18] sm:$0xff]
        %v786 = vld [vmem:[%s781 + $0x20] sm:$0xff]
        %v795 = vunpack.c.l.b16 %v773
        %v796 = vunpack.c.l.b16 %v774
        %v797 = vunpack.c.l.b16 %v775
        %v798 = vunpack.c.l.b16 %v776
        %v799 = vunpack.c.l.b16 %v777
        %v800 = vunpack.c.l.b16 %v778
        %v801 = vunpack.c.l.b16 %v779
        %v802 = vunpack.c.l.b16 %v780
        %v803 = vpack.c.b16 %v796, %v795
        %v804 = vpack.c.b16 %v798, %v797
        %v805 = vpack.c.b16 %v800, %v799
        %v806 = vpack.c.b16 %v802, %v801
        %v812 = vunpack.c.l.b16 %v782
        %v813 = vunpack.c.h.b16 %v782
        %v814 = vunpack.c.l.b16 %v783
        %v815 = vunpack.c.h.b16 %v783
        %v816 = vunpack.c.l.b16 %v784
        %v817 = vunpack.c.h.b16 %v784
        %v818 = vunpack.c.l.b16 %v785
        %v819 = vunpack.c.h.b16 %v785
        %v820 = vunpack.c.l.b16 %v786
        %v821 = vunpack.c.h.b16 %v786
        %v822 = vpack.c.b16 %v814, %v812
        %v823 = vpack.c.b16 %v815, %v813
        %v824 = vpack.c.b16 %v818, %v816
        %v825 = vpack.c.b16 %v819, %v817
        %v826 = vpack.c.b16 %v820, %v820
        %v827 = vpack.c.b16 %v821, %v821
        %v833 = vsel %vm263, %v803, 0
        %v836 = vsel %vm263, %v804, 0
        %v839 = vsel %vm263, %v805, 0
        %v842 = vsel %vm263, %v806, 0
        %v845 = vsel %vm276, %v826, 0
        %v848 = vsel %vm276, %v827, 0
        %850 = vmatpush.bf16.msra.mxu0 0
        %851 = vmatpush.bf16.msra.mxu0 0
        %852 = vmatpush.bf16.msra.mxu0 0
        %853 = vmatpush.bf16.msra.mxu0 0
        %854 = vmatpush.bf16.msra.mxu0 0
        %855 = vmatpush.bf16.msra.mxu0 %v845
        %856 = vmatpush.bf16.msra.mxu0 %v824
        %857 = vmatpush.bf16.msra.mxu0 %v822
        %858 = vmatmul.bf16.gmra.mxu0 %v833
        %v859 = vpop.f32.mrf.mxu0
        %v860 = vadd.f32 0.0, %v859
        %v861 = vpop.f32.mrf.mxu0
        %v862 = vadd.f32 0.0, %v861
        %863 = vmatmul.bf16.gmra.mxu0 %v836
        %v864 = vpop.f32.mrf.mxu0
        %v865 = vadd.f32 0.0, %v864
        %v866 = vpop.f32.mrf.mxu0
        %v867 = vadd.f32 0.0, %v866
        %868 = vmatmul.bf16.gmra.mxu0 %v839
        %v869 = vpop.f32.mrf.mxu0
        %v870 = vadd.f32 0.0, %v869
        %v871 = vpop.f32.mrf.mxu0
        %v872 = vadd.f32 0.0, %v871
        %873 = vmatmul.bf16.gmra.mxu0 %v842
        %v874 = vpop.f32.mrf.mxu0
        %v875 = vadd.f32 0.0, %v874
        %v876 = vpop.f32.mrf.mxu0
        %v877 = vadd.f32 0.0, %v876
        %878 = vdwg.mxu0
        %879 = vmatpush.bf16.msra.mxu0 0
        %880 = vmatpush.bf16.msra.mxu0 0
        %881 = vmatpush.bf16.msra.mxu0 0
        %882 = vmatpush.bf16.msra.mxu0 0
        %883 = vmatpush.bf16.msra.mxu0 0
        %884 = vmatpush.bf16.msra.mxu0 %v848
        %885 = vmatpush.bf16.msra.mxu0 %v825
        %886 = vmatpush.bf16.msra.mxu0 %v823
        %887 = vmatmul.bf16.gmra.mxu0 %v833
        %v888 = vpop.f32.mrf.mxu0
        %v889 = vadd.f32 0.0, %v888
        %v890 = vpop.f32.mrf.mxu0
        %v891 = vadd.f32 0.0, %v890
        %892 = vmatmul.bf16.gmra.mxu0 %v836
        %v893 = vpop.f32.mrf.mxu0
        %v894 = vadd.f32 0.0, %v893
        %v895 = vpop.f32.mrf.mxu0
        %v896 = vadd.f32 0.0, %v895
        %897 = vmatmul.bf16.gmra.mxu0 %v839
        %v898 = vpop.f32.mrf.mxu0
        %v899 = vadd.f32 0.0, %v898
        %v900 = vpop.f32.mrf.mxu0
        %v901 = vadd.f32 0.0, %v900
        %902 = vmatmul.bf16.gmra.mxu0 %v842
        %v903 = vpop.f32.mrf.mxu0
        %v904 = vadd.f32 0.0, %v903
        %v905 = vpop.f32.mrf.mxu0
        %v906 = vadd.f32 0.0, %v905
        %907 = vdwg.mxu0
        %v908 = vadd.f32 %v754, %v860
        %v909 = vadd.f32 %v755, %v889
        %v910 = vadd.f32 %v756, %v862
        %v911 = vadd.f32 %v757, %v891
        %v912 = vadd.f32 %v758, %v865
        %v913 = vadd.f32 %v759, %v894
        %v914 = vadd.f32 %v760, %v867
        %v915 = vadd.f32 %v761, %v896
        %v916 = vadd.f32 %v762, %v870
        %v917 = vadd.f32 %v763, %v899
        %v918 = vadd.f32 %v764, %v872
        %v919 = vadd.f32 %v765, %v901
        %v920 = vadd.f32 %v766, %v875
        %v921 = vadd.f32 %v767, %v904
        %v922 = vadd.f32 %v768, %v877
        %v923 = vadd.f32 %v769, %v906
        %s924 = sadd.s32 %s185, 5
        %s925 = smul.addr %s924, 4
        %s926 = scalar_lea.vmem %s182, %s925
        %v927 = vld [vmem:[%s926] sm:$0xf]
        %v928 = vld [vmem:[%s926 + $0x4] sm:$0xf]
        %v929 = vld [vmem:[%s926 + $0x8] sm:$0xf]
        %v930 = vld [vmem:[%s926 + $0xc] sm:$0xf]
        %v931 = vld [vmem:[%s926 + $0x10] sm:$0xf]
        %v932 = vld [vmem:[%s926 + $0x14] sm:$0xf]
        %v933 = vld [vmem:[%s926 + $0x18] sm:$0xf]
        %v934 = vld [vmem:[%s926 + $0x1c] sm:$0xf]
        %s935 = scalar_lea.vmem %s1, 200
        %v936 = vld [vmem:[%s935] sm:$0xff]
        %v937 = vld [vmem:[%s935 + $0x8] sm:$0xff]
        %v938 = vld [vmem:[%s935 + $0x10] sm:$0xff]
        %v939 = vld [vmem:[%s935 + $0x18] sm:$0xff]
        %v940 = vld [vmem:[%s935 + $0x20] sm:$0xff]
        %v949 = vunpack.c.l.b16 %v927
        %v950 = vunpack.c.l.b16 %v928
        %v951 = vunpack.c.l.b16 %v929
        %v952 = vunpack.c.l.b16 %v930
        %v953 = vunpack.c.l.b16 %v931
        %v954 = vunpack.c.l.b16 %v932
        %v955 = vunpack.c.l.b16 %v933
        %v956 = vunpack.c.l.b16 %v934
        %v957 = vpack.c.b16 %v950, %v949
        %v958 = vpack.c.b16 %v952, %v951
        %v959 = vpack.c.b16 %v954, %v953
        %v960 = vpack.c.b16 %v956, %v955
        %v966 = vunpack.c.l.b16 %v936
        %v967 = vunpack.c.h.b16 %v936
        %v968 = vunpack.c.l.b16 %v937
        %v969 = vunpack.c.h.b16 %v937
        %v970 = vunpack.c.l.b16 %v938
        %v971 = vunpack.c.h.b16 %v938
        %v972 = vunpack.c.l.b16 %v939
        %v973 = vunpack.c.h.b16 %v939
        %v974 = vunpack.c.l.b16 %v940
        %v975 = vunpack.c.h.b16 %v940
        %v976 = vpack.c.b16 %v968, %v966
        %v977 = vpack.c.b16 %v969, %v967
        %v978 = vpack.c.b16 %v972, %v970
        %v979 = vpack.c.b16 %v973, %v971
        %v980 = vpack.c.b16 %v974, %v974
        %v981 = vpack.c.b16 %v975, %v975
        %v987 = vsel %vm263, %v957, 0
        %v990 = vsel %vm263, %v958, 0
        %v993 = vsel %vm263, %v959, 0
        %v996 = vsel %vm263, %v960, 0
        %v999 = vsel %vm276, %v980, 0
        %v1002 = vsel %vm276, %v981, 0
        %1004 = vmatpush.bf16.msra.mxu0 0
        %1005 = vmatpush.bf16.msra.mxu0 0
        %1006 = vmatpush.bf16.msra.mxu0 0
        %1007 = vmatpush.bf16.msra.mxu0 0
        %1008 = vmatpush.bf16.msra.mxu0 0
        %1009 = vmatpush.bf16.msra.mxu0 %v999
        %1010 = vmatpush.bf16.msra.mxu0 %v978
        %1011 = vmatpush.bf16.msra.mxu0 %v976
        %1012 = vmatmul.bf16.gmra.mxu0 %v987
        %v1013 = vpop.f32.mrf.mxu0
        %v1014 = vadd.f32 0.0, %v1013
        %v1015 = vpop.f32.mrf.mxu0
        %v1016 = vadd.f32 0.0, %v1015
        %1017 = vmatmul.bf16.gmra.mxu0 %v990
        %v1018 = vpop.f32.mrf.mxu0
        %v1019 = vadd.f32 0.0, %v1018
        %v1020 = vpop.f32.mrf.mxu0
        %v1021 = vadd.f32 0.0, %v1020
        %1022 = vmatmul.bf16.gmra.mxu0 %v993
        %v1023 = vpop.f32.mrf.mxu0
        %v1024 = vadd.f32 0.0, %v1023
        %v1025 = vpop.f32.mrf.mxu0
        %v1026 = vadd.f32 0.0, %v1025
        %1027 = vmatmul.bf16.gmra.mxu0 %v996
        %v1028 = vpop.f32.mrf.mxu0
        %v1029 = vadd.f32 0.0, %v1028
        %v1030 = vpop.f32.mrf.mxu0
        %v1031 = vadd.f32 0.0, %v1030
        %1032 = vdwg.mxu0
        %1033 = vmatpush.bf16.msra.mxu0 0
        %1034 = vmatpush.bf16.msra.mxu0 0
        %1035 = vmatpush.bf16.msra.mxu0 0
        %1036 = vmatpush.bf16.msra.mxu0 0
        %1037 = vmatpush.bf16.msra.mxu0 0
        %1038 = vmatpush.bf16.msra.mxu0 %v1002
        %1039 = vmatpush.bf16.msra.mxu0 %v979
        %1040 = vmatpush.bf16.msra.mxu0 %v977
        %1041 = vmatmul.bf16.gmra.mxu0 %v987
        %v1042 = vpop.f32.mrf.mxu0
        %v1043 = vadd.f32 0.0, %v1042
        %v1044 = vpop.f32.mrf.mxu0
        %v1045 = vadd.f32 0.0, %v1044
        %1046 = vmatmul.bf16.gmra.mxu0 %v990
        %v1047 = vpop.f32.mrf.mxu0
        %v1048 = vadd.f32 0.0, %v1047
        %v1049 = vpop.f32.mrf.mxu0
        %v1050 = vadd.f32 0.0, %v1049
        %1051 = vmatmul.bf16.gmra.mxu0 %v993
        %v1052 = vpop.f32.mrf.mxu0
        %v1053 = vadd.f32 0.0, %v1052
        %v1054 = vpop.f32.mrf.mxu0
        %v1055 = vadd.f32 0.0, %v1054
        %1056 = vmatmul.bf16.gmra.mxu0 %v996
        %v1057 = vpop.f32.mrf.mxu0
        %v1058 = vadd.f32 0.0, %v1057
        %v1059 = vpop.f32.mrf.mxu0
        %v1060 = vadd.f32 0.0, %v1059
        %1061 = vdwg.mxu0
        %v1062 = vadd.f32 %v908, %v1014
        %v1063 = vadd.f32 %v909, %v1043
        %v1064 = vadd.f32 %v910, %v1016
        %v1065 = vadd.f32 %v911, %v1045
        %v1066 = vadd.f32 %v912, %v1019
        %v1067 = vadd.f32 %v913, %v1048
        %v1068 = vadd.f32 %v914, %v1021
        %v1069 = vadd.f32 %v915, %v1050
        %v1070 = vadd.f32 %v916, %v1024
        %v1071 = vadd.f32 %v917, %v1053
        %v1072 = vadd.f32 %v918, %v1026
        %v1073 = vadd.f32 %v919, %v1055
        %v1074 = vadd.f32 %v920, %v1029
        %v1075 = vadd.f32 %v921, %v1058
        %v1076 = vadd.f32 %v922, %v1031
        %v1077 = vadd.f32 %v923, %v1060
        %s1078 = sadd.s32 %s185, 6
        %s1079 = smul.addr %s1078, 4
        %s1080 = scalar_lea.vmem %s182, %s1079
        %v1081 = vld [vmem:[%s1080] sm:$0xf]
        %v1082 = vld [vmem:[%s1080 + $0x4] sm:$0xf]
        %v1083 = vld [vmem:[%s1080 + $0x8] sm:$0xf]
        %v1084 = vld [vmem:[%s1080 + $0xc] sm:$0xf]
        %v1085 = vld [vmem:[%s1080 + $0x10] sm:$0xf]
        %v1086 = vld [vmem:[%s1080 + $0x14] sm:$0xf]
        %v1087 = vld [vmem:[%s1080 + $0x18] sm:$0xf]
        %v1088 = vld [vmem:[%s1080 + $0x1c] sm:$0xf]
        %s1089 = scalar_lea.vmem %s1, 240
        %v1090 = vld [vmem:[%s1089] sm:$0xff]
        %v1091 = vld [vmem:[%s1089 + $0x8] sm:$0xff]
        %v1092 = vld [vmem:[%s1089 + $0x10] sm:$0xff]
        %v1093 = vld [vmem:[%s1089 + $0x18] sm:$0xff]
        %v1094 = vld [vmem:[%s1089 + $0x20] sm:$0xff]
        %v1103 = vunpack.c.l.b16 %v1081
        %v1104 = vunpack.c.l.b16 %v1082
        %v1105 = vunpack.c.l.b16 %v1083
        %v1106 = vunpack.c.l.b16 %v1084
        %v1107 = vunpack.c.l.b16 %v1085
        %v1108 = vunpack.c.l.b16 %v1086
        %v1109 = vunpack.c.l.b16 %v1087
        %v1110 = vunpack.c.l.b16 %v1088
        %v1111 = vpack.c.b16 %v1104, %v1103
        %v1112 = vpack.c.b16 %v1106, %v1105
        %v1113 = vpack.c.b16 %v1108, %v1107
        %v1114 = vpack.c.b16 %v1110, %v1109
        %v1120 = vunpack.c.l.b16 %v1090
        %v1121 = vunpack.c.h.b16 %v1090
        %v1122 = vunpack.c.l.b16 %v1091
        %v1123 = vunpack.c.h.b16 %v1091
        %v1124 = vunpack.c.l.b16 %v1092
        %v1125 = vunpack.c.h.b16 %v1092
        %v1126 = vunpack.c.l.b16 %v1093
        %v1127 = vunpack.c.h.b16 %v1093
        %v1128 = vunpack.c.l.b16 %v1094
        %v1129 = vunpack.c.h.b16 %v1094
        %v1130 = vpack.c.b16 %v1122, %v1120
        %v1131 = vpack.c.b16 %v1123, %v1121
        %v1132 = vpack.c.b16 %v1126, %v1124
        %v1133 = vpack.c.b16 %v1127, %v1125
        %v1134 = vpack.c.b16 %v1128, %v1128
        %v1135 = vpack.c.b16 %v1129, %v1129
        %v1141 = vsel %vm263, %v1111, 0
        %v1144 = vsel %vm263, %v1112, 0
        %v1147 = vsel %vm263, %v1113, 0
        %v1150 = vsel %vm263, %v1114, 0
        %v1153 = vsel %vm276, %v1134, 0
        %v1156 = vsel %vm276, %v1135, 0
        %1158 = vmatpush.bf16.msra.mxu0 0
        %1159 = vmatpush.bf16.msra.mxu0 0
        %1160 = vmatpush.bf16.msra.mxu0 0
        %1161 = vmatpush.bf16.msra.mxu0 0
        %1162 = vmatpush.bf16.msra.mxu0 0
        %1163 = vmatpush.bf16.msra.mxu0 %v1153
        %1164 = vmatpush.bf16.msra.mxu0 %v1132
        %1165 = vmatpush.bf16.msra.mxu0 %v1130
        %1166 = vmatmul.bf16.gmra.mxu0 %v1141
        %v1167 = vpop.f32.mrf.mxu0
        %v1168 = vadd.f32 0.0, %v1167
        %v1169 = vpop.f32.mrf.mxu0
        %v1170 = vadd.f32 0.0, %v1169
        %1171 = vmatmul.bf16.gmra.mxu0 %v1144
        %v1172 = vpop.f32.mrf.mxu0
        %v1173 = vadd.f32 0.0, %v1172
        %v1174 = vpop.f32.mrf.mxu0
        %v1175 = vadd.f32 0.0, %v1174
        %1176 = vmatmul.bf16.gmra.mxu0 %v1147
        %v1177 = vpop.f32.mrf.mxu0
        %v1178 = vadd.f32 0.0, %v1177
        %v1179 = vpop.f32.mrf.mxu0
        %v1180 = vadd.f32 0.0, %v1179
        %1181 = vmatmul.bf16.gmra.mxu0 %v1150
        %v1182 = vpop.f32.mrf.mxu0
        %v1183 = vadd.f32 0.0, %v1182
        %v1184 = vpop.f32.mrf.mxu0
        %v1185 = vadd.f32 0.0, %v1184
        %1186 = vdwg.mxu0
        %1187 = vmatpush.bf16.msra.mxu0 0
        %1188 = vmatpush.bf16.msra.mxu0 0
        %1189 = vmatpush.bf16.msra.mxu0 0
        %1190 = vmatpush.bf16.msra.mxu0 0
        %1191 = vmatpush.bf16.msra.mxu0 0
        %1192 = vmatpush.bf16.msra.mxu0 %v1156
        %1193 = vmatpush.bf16.msra.mxu0 %v1133
        %1194 = vmatpush.bf16.msra.mxu0 %v1131
        %1195 = vmatmul.bf16.gmra.mxu0 %v1141
        %v1196 = vpop.f32.mrf.mxu0
        %v1197 = vadd.f32 0.0, %v1196
        %v1198 = vpop.f32.mrf.mxu0
        %v1199 = vadd.f32 0.0, %v1198
        %1200 = vmatmul.bf16.gmra.mxu0 %v1144
        %v1201 = vpop.f32.mrf.mxu0
        %v1202 = vadd.f32 0.0, %v1201
        %v1203 = vpop.f32.mrf.mxu0
        %v1204 = vadd.f32 0.0, %v1203
        %1205 = vmatmul.bf16.gmra.mxu0 %v1147
        %v1206 = vpop.f32.mrf.mxu0
        %v1207 = vadd.f32 0.0, %v1206
        %v1208 = vpop.f32.mrf.mxu0
        %v1209 = vadd.f32 0.0, %v1208
        %1210 = vmatmul.bf16.gmra.mxu0 %v1150
        %v1211 = vpop.f32.mrf.mxu0
        %v1212 = vadd.f32 0.0, %v1211
        %v1213 = vpop.f32.mrf.mxu0
        %v1214 = vadd.f32 0.0, %v1213
        %1215 = vdwg.mxu0
        %v1216 = vadd.f32 %v1062, %v1168
        %v1217 = vadd.f32 %v1063, %v1197
        %v1218 = vadd.f32 %v1064, %v1170
        %v1219 = vadd.f32 %v1065, %v1199
        %v1220 = vadd.f32 %v1066, %v1173
        %v1221 = vadd.f32 %v1067, %v1202
        %v1222 = vadd.f32 %v1068, %v1175
        %v1223 = vadd.f32 %v1069, %v1204
        %v1224 = vadd.f32 %v1070, %v1178
        %v1225 = vadd.f32 %v1071, %v1207
        %v1226 = vadd.f32 %v1072, %v1180
        %v1227 = vadd.f32 %v1073, %v1209
        %v1228 = vadd.f32 %v1074, %v1183
        %v1229 = vadd.f32 %v1075, %v1212
        %v1230 = vadd.f32 %v1076, %v1185
        %v1231 = vadd.f32 %v1077, %v1214
        %s1232 = sadd.s32 %s185, 7
        %s1233 = smul.addr %s1232, 4
        %s1234 = scalar_lea.vmem %s182, %s1233
        %v1235 = vld [vmem:[%s1234] sm:$0xf]
        %v1236 = vld [vmem:[%s1234 + $0x4] sm:$0xf]
        %v1237 = vld [vmem:[%s1234 + $0x8] sm:$0xf]
        %v1238 = vld [vmem:[%s1234 + $0xc] sm:$0xf]
        %v1239 = vld [vmem:[%s1234 + $0x10] sm:$0xf]
        %v1240 = vld [vmem:[%s1234 + $0x14] sm:$0xf]
        %v1241 = vld [vmem:[%s1234 + $0x18] sm:$0xf]
        %v1242 = vld [vmem:[%s1234 + $0x1c] sm:$0xf]
        %s1243 = scalar_lea.vmem %s1, 280
        %v1244 = vld [vmem:[%s1243] sm:$0xff]
        %v1245 = vld [vmem:[%s1243 + $0x8] sm:$0xff]
        %v1246 = vld [vmem:[%s1243 + $0x10] sm:$0xff]
        %v1247 = vld [vmem:[%s1243 + $0x18] sm:$0xff]
        %v1248 = vld [vmem:[%s1243 + $0x20] sm:$0xff]
        %v1257 = vunpack.c.l.b16 %v1235
        %v1258 = vunpack.c.l.b16 %v1236
        %v1259 = vunpack.c.l.b16 %v1237
        %v1260 = vunpack.c.l.b16 %v1238
        %v1261 = vunpack.c.l.b16 %v1239
        %v1262 = vunpack.c.l.b16 %v1240
        %v1263 = vunpack.c.l.b16 %v1241
        %v1264 = vunpack.c.l.b16 %v1242
        %v1265 = vpack.c.b16 %v1258, %v1257
        %v1266 = vpack.c.b16 %v1260, %v1259
        %v1267 = vpack.c.b16 %v1262, %v1261
        %v1268 = vpack.c.b16 %v1264, %v1263
        %v1274 = vunpack.c.l.b16 %v1244
        %v1275 = vunpack.c.h.b16 %v1244
        %v1276 = vunpack.c.l.b16 %v1245
        %v1277 = vunpack.c.h.b16 %v1245
        %v1278 = vunpack.c.l.b16 %v1246
        %v1279 = vunpack.c.h.b16 %v1246
        %v1280 = vunpack.c.l.b16 %v1247
        %v1281 = vunpack.c.h.b16 %v1247
        %v1282 = vunpack.c.l.b16 %v1248
        %v1283 = vunpack.c.h.b16 %v1248
        %v1284 = vpack.c.b16 %v1276, %v1274
        %v1285 = vpack.c.b16 %v1277, %v1275
        %v1286 = vpack.c.b16 %v1280, %v1278
        %v1287 = vpack.c.b16 %v1281, %v1279
        %v1288 = vpack.c.b16 %v1282, %v1282
        %v1289 = vpack.c.b16 %v1283, %v1283
        %v1295 = vsel %vm263, %v1265, 0
        %v1298 = vsel %vm263, %v1266, 0
        %v1301 = vsel %vm263, %v1267, 0
        %v1304 = vsel %vm263, %v1268, 0
        %v1307 = vsel %vm276, %v1288, 0
        %v1310 = vsel %vm276, %v1289, 0
        %1312 = vmatpush.bf16.msra.mxu0 0
        %1313 = vmatpush.bf16.msra.mxu0 0
        %1314 = vmatpush.bf16.msra.mxu0 0
        %1315 = vmatpush.bf16.msra.mxu0 0
        %1316 = vmatpush.bf16.msra.mxu0 0
        %1317 = vmatpush.bf16.msra.mxu0 %v1307
        %1318 = vmatpush.bf16.msra.mxu0 %v1286
        %1319 = vmatpush.bf16.msra.mxu0 %v1284
        %1320 = vmatmul.bf16.gmra.mxu0 %v1295
        %v1321 = vpop.f32.mrf.mxu0
        %v1322 = vadd.f32 0.0, %v1321
        %v1323 = vpop.f32.mrf.mxu0
        %v1324 = vadd.f32 0.0, %v1323
        %1325 = vmatmul.bf16.gmra.mxu0 %v1298
        %v1326 = vpop.f32.mrf.mxu0
        %v1327 = vadd.f32 0.0, %v1326
        %v1328 = vpop.f32.mrf.mxu0
        %v1329 = vadd.f32 0.0, %v1328
        %1330 = vmatmul.bf16.gmra.mxu0 %v1301
        %v1331 = vpop.f32.mrf.mxu0
        %v1332 = vadd.f32 0.0, %v1331
        %v1333 = vpop.f32.mrf.mxu0
        %v1334 = vadd.f32 0.0, %v1333
        %1335 = vmatmul.bf16.gmra.mxu0 %v1304
        %v1336 = vpop.f32.mrf.mxu0
        %v1337 = vadd.f32 0.0, %v1336
        %v1338 = vpop.f32.mrf.mxu0
        %v1339 = vadd.f32 0.0, %v1338
        %1340 = vdwg.mxu0
        %1341 = vmatpush.bf16.msra.mxu0 0
        %1342 = vmatpush.bf16.msra.mxu0 0
        %1343 = vmatpush.bf16.msra.mxu0 0
        %1344 = vmatpush.bf16.msra.mxu0 0
        %1345 = vmatpush.bf16.msra.mxu0 0
        %1346 = vmatpush.bf16.msra.mxu0 %v1310
        %1347 = vmatpush.bf16.msra.mxu0 %v1287
        %1348 = vmatpush.bf16.msra.mxu0 %v1285
        %1349 = vmatmul.bf16.gmra.mxu0 %v1295
        %v1350 = vpop.f32.mrf.mxu0
        %v1351 = vadd.f32 0.0, %v1350
        %v1352 = vpop.f32.mrf.mxu0
        %v1353 = vadd.f32 0.0, %v1352
        %1354 = vmatmul.bf16.gmra.mxu0 %v1298
        %v1355 = vpop.f32.mrf.mxu0
        %v1356 = vadd.f32 0.0, %v1355
        %v1357 = vpop.f32.mrf.mxu0
        %v1358 = vadd.f32 0.0, %v1357
        %1359 = vmatmul.bf16.gmra.mxu0 %v1301
        %v1360 = vpop.f32.mrf.mxu0
        %v1361 = vadd.f32 0.0, %v1360
        %v1362 = vpop.f32.mrf.mxu0
        %v1363 = vadd.f32 0.0, %v1362
        %1364 = vmatmul.bf16.gmra.mxu0 %v1304
        %v1365 = vpop.f32.mrf.mxu0
        %v1366 = vadd.f32 0.0, %v1365
        %v1367 = vpop.f32.mrf.mxu0
        %v1368 = vadd.f32 0.0, %v1367
        %1369 = vdwg.mxu0
        %v1370 = vadd.f32 %v1216, %v1322
        %v1371 = vadd.f32 %v1217, %v1351
        %v1372 = vadd.f32 %v1218, %v1324
        %v1373 = vadd.f32 %v1219, %v1353
        %v1374 = vadd.f32 %v1220, %v1327
        %v1375 = vadd.f32 %v1221, %v1356
        %v1376 = vadd.f32 %v1222, %v1329
        %v1377 = vadd.f32 %v1223, %v1358
        %v1378 = vadd.f32 %v1224, %v1332
        %v1379 = vadd.f32 %v1225, %v1361
        %v1380 = vadd.f32 %v1226, %v1334
        %v1381 = vadd.f32 %v1227, %v1363
        %v1382 = vadd.f32 %v1228, %v1337
        %v1383 = vadd.f32 %v1229, %v1366
        %v1384 = vadd.f32 %v1230, %v1339
        %v1385 = vadd.f32 %v1231, %v1368
        %s1386 = sadd.s32 %s185, 8
        %s1387 = smul.addr %s1386, 4
        %s1388 = scalar_lea.vmem %s182, %s1387
        %v1389 = vld [vmem:[%s1388] sm:$0xf]
        %v1390 = vld [vmem:[%s1388 + $0x4] sm:$0xf]
        %v1391 = vld [vmem:[%s1388 + $0x8] sm:$0xf]
        %v1392 = vld [vmem:[%s1388 + $0xc] sm:$0xf]
        %v1393 = vld [vmem:[%s1388 + $0x10] sm:$0xf]
        %v1394 = vld [vmem:[%s1388 + $0x14] sm:$0xf]
        %v1395 = vld [vmem:[%s1388 + $0x18] sm:$0xf]
        %v1396 = vld [vmem:[%s1388 + $0x1c] sm:$0xf]
        %s1397 = scalar_lea.vmem %s1, 320
        %v1398 = vld [vmem:[%s1397] sm:$0xff]
        %v1399 = vld [vmem:[%s1397 + $0x8] sm:$0xff]
        %v1400 = vld [vmem:[%s1397 + $0x10] sm:$0xff]
        %v1401 = vld [vmem:[%s1397 + $0x18] sm:$0xff]
        %v1402 = vld [vmem:[%s1397 + $0x20] sm:$0xff]
        %v1411 = vunpack.c.l.b16 %v1389
        %v1412 = vunpack.c.l.b16 %v1390
        %v1413 = vunpack.c.l.b16 %v1391
        %v1414 = vunpack.c.l.b16 %v1392
        %v1415 = vunpack.c.l.b16 %v1393
        %v1416 = vunpack.c.l.b16 %v1394
        %v1417 = vunpack.c.l.b16 %v1395
        %v1418 = vunpack.c.l.b16 %v1396
        %v1419 = vpack.c.b16 %v1412, %v1411
        %v1420 = vpack.c.b16 %v1414, %v1413
        %v1421 = vpack.c.b16 %v1416, %v1415
        %v1422 = vpack.c.b16 %v1418, %v1417
        %v1428 = vunpack.c.l.b16 %v1398
        %v1429 = vunpack.c.h.b16 %v1398
        %v1430 = vunpack.c.l.b16 %v1399
        %v1431 = vunpack.c.h.b16 %v1399
        %v1432 = vunpack.c.l.b16 %v1400
        %v1433 = vunpack.c.h.b16 %v1400
        %v1434 = vunpack.c.l.b16 %v1401
        %v1435 = vunpack.c.h.b16 %v1401
        %v1436 = vunpack.c.l.b16 %v1402
        %v1437 = vunpack.c.h.b16 %v1402
        %v1438 = vpack.c.b16 %v1430, %v1428
        %v1439 = vpack.c.b16 %v1431, %v1429
        %v1440 = vpack.c.b16 %v1434, %v1432
        %v1441 = vpack.c.b16 %v1435, %v1433
        %v1442 = vpack.c.b16 %v1436, %v1436
        %v1443 = vpack.c.b16 %v1437, %v1437
        %v1449 = vsel %vm263, %v1419, 0
        %v1452 = vsel %vm263, %v1420, 0
        %v1455 = vsel %vm263, %v1421, 0
        %v1458 = vsel %vm263, %v1422, 0
        %v1461 = vsel %vm276, %v1442, 0
        %v1464 = vsel %vm276, %v1443, 0
        %1466 = vmatpush.bf16.msra.mxu0 0
        %1467 = vmatpush.bf16.msra.mxu0 0
        %1468 = vmatpush.bf16.msra.mxu0 0
        %1469 = vmatpush.bf16.msra.mxu0 0
        %1470 = vmatpush.bf16.msra.mxu0 0
        %1471 = vmatpush.bf16.msra.mxu0 %v1461
        %1472 = vmatpush.bf16.msra.mxu0 %v1440
        %1473 = vmatpush.bf16.msra.mxu0 %v1438
        %1474 = vmatmul.bf16.gmra.mxu0 %v1449
        %v1475 = vpop.f32.mrf.mxu0
        %v1476 = vadd.f32 0.0, %v1475
        %v1477 = vpop.f32.mrf.mxu0
        %v1478 = vadd.f32 0.0, %v1477
        %1479 = vmatmul.bf16.gmra.mxu0 %v1452
        %v1480 = vpop.f32.mrf.mxu0
        %v1481 = vadd.f32 0.0, %v1480
        %v1482 = vpop.f32.mrf.mxu0
        %v1483 = vadd.f32 0.0, %v1482
        %1484 = vmatmul.bf16.gmra.mxu0 %v1455
        %v1485 = vpop.f32.mrf.mxu0
        %v1486 = vadd.f32 0.0, %v1485
        %v1487 = vpop.f32.mrf.mxu0
        %v1488 = vadd.f32 0.0, %v1487
        %1489 = vmatmul.bf16.gmra.mxu0 %v1458
        %v1490 = vpop.f32.mrf.mxu0
        %v1491 = vadd.f32 0.0, %v1490
        %v1492 = vpop.f32.mrf.mxu0
        %v1493 = vadd.f32 0.0, %v1492
        %1494 = vdwg.mxu0
        %1495 = vmatpush.bf16.msra.mxu0 0
        %1496 = vmatpush.bf16.msra.mxu0 0
        %1497 = vmatpush.bf16.msra.mxu0 0
        %1498 = vmatpush.bf16.msra.mxu0 0
        %1499 = vmatpush.bf16.msra.mxu0 0
        %1500 = vmatpush.bf16.msra.mxu0 %v1464
        %1501 = vmatpush.bf16.msra.mxu0 %v1441
        %1502 = vmatpush.bf16.msra.mxu0 %v1439
        %1503 = vmatmul.bf16.gmra.mxu0 %v1449
        %v1504 = vpop.f32.mrf.mxu0
        %v1505 = vadd.f32 0.0, %v1504
        %v1506 = vpop.f32.mrf.mxu0
        %v1507 = vadd.f32 0.0, %v1506
        %1508 = vmatmul.bf16.gmra.mxu0 %v1452
        %v1509 = vpop.f32.mrf.mxu0
        %v1510 = vadd.f32 0.0, %v1509
        %v1511 = vpop.f32.mrf.mxu0
        %v1512 = vadd.f32 0.0, %v1511
        %1513 = vmatmul.bf16.gmra.mxu0 %v1455
        %v1514 = vpop.f32.mrf.mxu0
        %v1515 = vadd.f32 0.0, %v1514
        %v1516 = vpop.f32.mrf.mxu0
        %v1517 = vadd.f32 0.0, %v1516
        %1518 = vmatmul.bf16.gmra.mxu0 %v1458
        %v1519 = vpop.f32.mrf.mxu0
        %v1520 = vadd.f32 0.0, %v1519
        %v1521 = vpop.f32.mrf.mxu0
        %v1522 = vadd.f32 0.0, %v1521
        %1523 = vdwg.mxu0
        %v1524 = vadd.f32 %v1370, %v1476
        %v1525 = vadd.f32 %v1371, %v1505
        %v1526 = vadd.f32 %v1372, %v1478
        %v1527 = vadd.f32 %v1373, %v1507
        %v1528 = vadd.f32 %v1374, %v1481
        %v1529 = vadd.f32 %v1375, %v1510
        %v1530 = vadd.f32 %v1376, %v1483
        %v1531 = vadd.f32 %v1377, %v1512
        %v1532 = vadd.f32 %v1378, %v1486
        %v1533 = vadd.f32 %v1379, %v1515
        %v1534 = vadd.f32 %v1380, %v1488
        %v1535 = vadd.f32 %v1381, %v1517
        %v1536 = vadd.f32 %v1382, %v1491
        %v1537 = vadd.f32 %v1383, %v1520
        %v1538 = vadd.f32 %v1384, %v1493
        %v1539 = vadd.f32 %v1385, %v1522
        %v1540 = vld [vmem:[%s2] sm:$0x3]
        %v1542 = vperm.slane %v1540, 0
        %v1543 = vperm.slane %v1540, 1
        %v1546 = vadd.f32 %v1524, %v1542
        %v1547 = vadd.f32 %v1525, %v1543
        %v1548 = vadd.f32 %v1526, %v1542
        %v1549 = vadd.f32 %v1527, %v1543
        %v1550 = vadd.f32 %v1528, %v1542
        %v1551 = vadd.f32 %v1529, %v1543
        %v1552 = vadd.f32 %v1530, %v1542
        %v1553 = vadd.f32 %v1531, %v1543
        %v1554 = vadd.f32 %v1532, %v1542
        %v1555 = vadd.f32 %v1533, %v1543
        %v1556 = vadd.f32 %v1534, %v1542
        %v1557 = vadd.f32 %v1535, %v1543
        %v1558 = vadd.f32 %v1536, %v1542
        %v1559 = vadd.f32 %v1537, %v1543
        %v1560 = vadd.f32 %v1538, %v1542
        %v1561 = vadd.f32 %v1539, %v1543
        %v1562 = vmax.f32 %v1546, 0.0
        %v1563 = vmax.f32 %v1547, 0.0
        %v1564 = vmax.f32 %v1548, 0.0
        %v1565 = vmax.f32 %v1549, 0.0
        %v1566 = vmax.f32 %v1550, 0.0
        %v1567 = vmax.f32 %v1551, 0.0
        %v1568 = vmax.f32 %v1552, 0.0
        %v1569 = vmax.f32 %v1553, 0.0
        %v1570 = vmax.f32 %v1554, 0.0
        %v1571 = vmax.f32 %v1555, 0.0
        %v1572 = vmax.f32 %v1556, 0.0
        %v1573 = vmax.f32 %v1557, 0.0
        %v1574 = vmax.f32 %v1558, 0.0
        %v1575 = vmax.f32 %v1559, 0.0
        %v1576 = vmax.f32 %v1560, 0.0
        %v1577 = vmax.f32 %v1561, 0.0
        %1578 = vst [vmem:[%s177] sm:$0xff] %v1562
        %1579 = vst [vmem:[%s177 + $0x8] sm:$0xff] %v1563
        %1580 = vst [vmem:[%s177 + $0x10] sm:$0xff] %v1564
        %1581 = vst [vmem:[%s177 + $0x18] sm:$0xff] %v1565
        %1582 = vst [vmem:[%s177 + $0x20] sm:$0xff] %v1566
        %1583 = vst [vmem:[%s177 + $0x28] sm:$0xff] %v1567
        %1584 = vst [vmem:[%s177 + $0x30] sm:$0xff] %v1568
        %1585 = vst [vmem:[%s177 + $0x38] sm:$0xff] %v1569
        %1586 = vst [vmem:[%s177 + $0x40] sm:$0xff] %v1570
        %1587 = vst [vmem:[%s177 + $0x48] sm:$0xff] %v1571
        %1588 = vst [vmem:[%s177 + $0x50] sm:$0xff] %v1572
        %1589 = vst [vmem:[%s177 + $0x58] sm:$0xff] %v1573
        %1590 = vst [vmem:[%s177 + $0x60] sm:$0xff] %v1574
        %1591 = vst [vmem:[%s177 + $0x68] sm:$0xff] %v1575
        %1592 = vst [vmem:[%s177 + $0x70] sm:$0xff] %v1576
        %1593 = vst [vmem:[%s177 + $0x78] sm:$0xff] %v1577
        %s1594 = sand.u32 %s107, 1
        %s1595 = scalar_lea.sflag [#allocation3], %s1594
        %s1596 = sand.u32 %s107, 1
        %s1597 = smul.addr %s1596, 128
        %s1598 = scalar_lea.vmem [#allocation2], %s1597
        // Predicated region
        $region33: #{conv_layer_forward.1} parent=31 // pred_check
          %p1599 = pneg %p117
        $region34: #{conv_layer_forward.1} parent=31 // pred_check_branch
          %1601 = sbr.rel (%p1599) target = $region36
        $region35: #{conv_layer_forward.1} parent=31 // pred_region
          %s1602 = smul.u32 8, %s22
          %1604 = vsyncadd %s1595, 0
          %s1605 = smul.addr %s1602, 2
          %s1606 = smul.addr %s21, 16
          %s1607 = sadd.s32 %s1605, %s1606
          %s1608 = smul.addr %s1607, 8
          %s1609 = scalar_lea.hbm %s3, %s1608
          %s1610 = sshll.u32 %s1598, 4
          %s1611 = int_to_ptr.vmem [resolvable:$true] %s1610
          %s1612 = sshll.u32 %s1609, 4
          %s1613 = int_to_ptr.hbm [resolvable:$true] %s1612
          %1618 = dma.vmem_to_hbm [thread:$0]  %s1611, 2048, %s1613, %s1595, 256, 256, 16
        $region36: #{conv_layer_forward.1} parent=31 // pred_fallthru
          _
      $region32: #{conv_layer_forward.1} parent=5 // pred_fallthru
        _
      %p1619 = scmp.le.s32.totalorder 2, %s12
      // Predicated region
      $region37: #{conv_layer_forward.1} parent=5 // pred_check
        %p1620 = pneg %p1619
      $region38: #{conv_layer_forward.1} parent=5 // pred_check_branch
        %1622 = sbr.rel (%p1620) target = $region40
      $region39: #{conv_layer_forward.1} parent=5 // pred_region
        %s1623 = ssub.s32 %s12, 2
        // Predicated region
        $region41: #{conv_layer_forward.1} parent=39 // pred_check
          %p1624 = pneg %p123
        $region42: #{conv_layer_forward.1} parent=39 // pred_check_branch
          %1626 = sbr.rel (%p1624) target = $region44
        $region43: #{conv_layer_forward.1} parent=39 // pred_region
          %s1627 = sand.u32 %s108, 1
          %s1628 = scalar_lea.sflag [#allocation3], %s1627
          %s1629 = sand.u32 %s108, 1
          %s1630 = smul.addr %s1629, 128
          %s1631 = scalar_lea.vmem [#allocation2], %s1630
          %1633 = dma.done %s1628, 2048
        $region44: #{conv_layer_forward.1} parent=39 // pred_fallthru
          _
      $region40: #{conv_layer_forward.1} parent=5 // pred_fallthru
        _
    $region6: #{conv_layer_forward.1} parent=1 // loop_footer
      %s16 = sadd.s32 1, %s12
    $region7: #{conv_layer_forward.1} parent=1 // loop_footer_branch
      %11 = sbr.rel target = $region3
    $region8: #{conv_layer_forward.1} parent=1 // loop_exit
      _
    %1634 = vsyncpa [#allocation3], 1
    %s1635 = scalar_lea.sflag [#allocation3], 1
    %1636 = vsyncpa %s1635, 1

</llo_original>
